<compile_context>
chip_gen: v5e
topology: v5e:2x2
jax: 0.10.0
libtpu: 0.0.40
codegen_flags: <defaults>
</compile_context>

<pallas_src>
import functools
import math

import jax
import jax.numpy as jnp
from jax import lax
from jax.experimental import pallas as pl
from jax.experimental.pallas import tpu as pltpu


def mha_kernel(q_in, k_in, v_in, m_in,
               wq_h, bq_h, wk_h, bk_h, wv_h, bv_h, wo_h, bo,
               out_ref, *, n_head):
    """One (batch, q-tile) step of multi-head attention.

    Ref shapes for one grid step (b, qi):
      q_in: (1, TQ, F)        k_in / v_in: (1, T2, F)       m_in: (1, TQ, T2)
      wq_h/wk_h/wv_h: (H, F, d_k) bf16  (pre-transposed; Wq pre-scaled by 1/sqrt(d_k))
      bq_h/bk_h/bv_h: (H, 1, d_k) f32   (bq pre-scaled)
      wo_h: (H, d_k, F) bf16            bo: (1, F) f32
      out_ref: (1, TQ, F)
    """
    neg_inf = float(jnp.finfo(jnp.float32).min)
    nt_dims = (((1,), (1,)), ((), ()))           # contract last dims, no batch (NT matmul)

    # bf16 activations feed the MXU; every matmul accumulates in f32.
    q_x = q_in[0].astype(jnp.bfloat16)           # (TQ, F)
    k_x = k_in[0].astype(jnp.bfloat16)           # (T2, F)
    v_x = v_in[0].astype(jnp.bfloat16)           # (T2, F)
    masked = m_in[0] == 0.0                      # (TQ, T2); 0.0 => masked out

    acc = jnp.zeros((q_x.shape[0], out_ref.shape[2]), jnp.float32)

    for h in range(n_head):                      # small static loop over heads
        # Per-head projections: weight tiles are already W^T per head, so there is
        # no lane-axis slicing of activations and no in-kernel transpose.
        qh = jnp.dot(q_x, wq_h[h], preferred_element_type=jnp.float32) + bq_h[h]   # (TQ, d_k), pre-scaled
        kh = jnp.dot(k_x, wk_h[h], preferred_element_type=jnp.float32) + bk_h[h]   # (T2, d_k)
        vh = jnp.dot(v_x, wv_h[h], preferred_element_type=jnp.float32) + bv_h[h]   # (T2, d_k)

        # scores = q . k^T without materializing k^T (NT dot_general).
        scores = lax.dot_general(qh.astype(jnp.bfloat16), kh.astype(jnp.bfloat16),
                                 nt_dims, preferred_element_type=jnp.float32)      # (TQ, T2)
        scores = jnp.where(masked, neg_inf, scores)

        # Numerically stable softmax over time2. denom >= 1 always (exp(0) term),
        # so there is no NaN risk even for fully-masked rows.
        smax = jnp.max(scores, axis=-1, keepdims=True)
        e = jnp.exp(scores - smax)
        denom = jnp.sum(e, axis=-1, keepdims=True)
        attn = e * pl.reciprocal(denom, approx=True)     # divide on the EUP slot
        attn = jnp.where(masked, 0.0, attn)              # matches masked_fill after softmax
        # TODO(synk): dropout on attn is identity here (eval-mode semantics).

        ctx = jnp.dot(attn.astype(jnp.bfloat16), vh.astype(jnp.bfloat16),
                      preferred_element_type=jnp.float32)                           # (TQ, d_k)
        # Fused output projection: accumulate this head's slice of Wo directly.
        # No concatenate / lane re-stitching.
        acc = acc + jnp.dot(ctx.astype(jnp.bfloat16), wo_h[h],
                            preferred_element_type=jnp.float32)                     # (TQ, F)

    out_ref[0] = (acc + bo[...]).astype(out_ref.dtype)


def _pick_q_tile(t1, max_tile=512):
    """Largest query tile <= max_tile that divides T1 (multiple of 8), else T1."""
    if t1 <= max_tile:
        return t1
    for cand in range(max_tile, 7, -8):
        if t1 % cand == 0:
            return cand
    return t1


def _prep_params(params, n_head, n_feat):
    """Pre-transpose / head-split / pre-scale / bf16-cast the weights once, outside the kernel."""
    d_k = n_feat // n_head
    scale = 1.0 / math.sqrt(d_k)
    wq, bq, wk, bk, wv, bv, wo, bo = params

    def split_in(w):  # nn.Linear weight (F_out, F_in) -> (H, F_in, d_k) so y_h = x @ w_h
        return jnp.transpose(w.T.reshape(n_feat, n_head, d_k), (1, 0, 2))

    wq_h = (split_in(wq) * scale).astype(jnp.bfloat16)   # fold 1/sqrt(d_k) into Wq
    wk_h = split_in(wk).astype(jnp.bfloat16)
    wv_h = split_in(wv).astype(jnp.bfloat16)
    wo_h = wo.T.reshape(n_head, d_k, n_feat).astype(jnp.bfloat16)

    bq_h = (bq * scale).reshape(n_head, 1, d_k).astype(jnp.float32)
    bk_h = bk.reshape(n_head, 1, d_k).astype(jnp.float32)
    bv_h = bv.reshape(n_head, 1, d_k).astype(jnp.float32)
    bo2 = bo.reshape(1, n_feat).astype(jnp.float32)
    return wq_h, bq_h, wk_h, bk_h, wv_h, bv_h, wo_h, bo2


def multi_headed_attention(query, key, value, mask, params, n_head):
    B, T1, F = query.shape
    T2 = key.shape[1]
    assert F % n_head == 0

    wq_h, bq_h, wk_h, bk_h, wv_h, bv_h, wo_h, bo2 = _prep_params(params, n_head, F)

    tq = _pick_q_tile(T1)
    n_qt = T1 // tq

    kernel = functools.partial(mha_kernel, n_head=n_head)

    q_spec = pl.BlockSpec((1, tq, F), lambda b, qi: (b, qi, 0))
    kv_spec = pl.BlockSpec((1, T2, F), lambda b, qi: (b, 0, 0))
    # TODO(synk): for long sequences replace the dense (B,T1,T2) f32 mask with
    # per-batch key lengths via PrefetchScalarGridSpec + broadcasted_iota, and add
    # flash-style online-softmax tiling over T2 to bound VMEM.
    m_spec = pl.BlockSpec((1, tq, T2), lambda b, qi: (b, qi, 0))

    def const3(shape):
        return pl.BlockSpec(shape, lambda b, qi: (0, 0, 0))

    bo_spec = pl.BlockSpec(bo2.shape, lambda b, qi: (0, 0))
    out_spec = pl.BlockSpec((1, tq, F), lambda b, qi: (b, qi, 0))

    in_specs = [
        q_spec, kv_spec, kv_spec, m_spec,
        const3(wq_h.shape), const3(bq_h.shape),
        const3(wk_h.shape), const3(bk_h.shape),
        const3(wv_h.shape), const3(bv_h.shape),
        const3(wo_h.shape), bo_spec,
    ]

    # TODO(synk): when T1 >> tq, hoist the K/V projections into a separate GEMM
    # kernel so they are not recomputed for every q-tile.
    return pl.pallas_call(
        kernel,
        out_shape=jax.ShapeDtypeStruct((B, T1, F), jnp.float32),
        grid=(B, n_qt),
        in_specs=in_specs,
        out_specs=out_spec,
        compiler_params=pltpu.CompilerParams(
            dimension_semantics=("parallel", "parallel"),
            vmem_limit_bytes=64 * 1024 * 1024,
        ),
    )(query, key, value, mask,
      wq_h, bq_h, wk_h, bk_h, wv_h, bv_h, wo_h, bo2)


def _torch_linear_init(key, out_features, in_features):
    """Deterministic nn.Linear-style init: U(-1/sqrt(in), 1/sqrt(in))."""
    kw, kb = jax.random.split(key)
    bound = 1.0 / math.sqrt(in_features)
    w = jax.random.uniform(kw, (out_features, in_features), jnp.float32,
                           minval=-bound, maxval=bound)
    b = jax.random.uniform(kb, (out_features,), jnp.float32,
                           minval=-bound, maxval=bound)
    return w, b


def _reference(query, key, value, mask, params, n_head):
    """Pure-JAX f32 reference mirroring the PyTorch forward (eval mode)."""
    B, T1, F = query.shape
    d_k = F // n_head
    wq, bq, wk, bk, wv, bv, wo, bo = params
    q = query @ wq.T + bq
    k = key @ wk.T + bk
    v = value @ wv.T + bv
    q = q.reshape(B, -1, n_head, d_k).transpose(0, 2, 1, 3)
    k = k.reshape(B, -1, n_head, d_k).transpose(0, 2, 1, 3)
    v = v.reshape(B, -1, n_head, d_k).transpose(0, 2, 1, 3)
    scores = jnp.einsum('bhqd,bhkd->bhqk', q, k) / math.sqrt(d_k)
    m = (mask[:, None, :, :] == 0.0)
    min_value = float(jnp.finfo(jnp.float32).min)
    scores = jnp.where(m, min_value, scores)
    attn = jax.nn.softmax(scores, axis=-1)
    attn = jnp.where(m, 0.0, attn)
    x = jnp.einsum('bhqk,bhkd->bhqd', attn, v)
    x = x.transpose(0, 2, 1, 3).reshape(B, -1, F)
    return x @ wo.T + bo


if __name__ == "__main__":
    n_head = 4
    n_feat = 32
    B, T1, T2 = 2, 8, 8

    root = jax.random.PRNGKey(0)
    keys = jax.random.split(root, 8)

    query = jax.random.normal(keys[0], (B, T1, n_feat), jnp.float32)
    key_t = jax.random.normal(keys[1], (B, T2, n_feat), jnp.float32)
    value = jax.random.normal(keys[2], (B, T2, n_feat), jnp.float32)

    # mask: 1.0 = keep, 0.0 = masked (mimics padding mask of lengths [8, 5])
    lengths = jnp.array([T2, 5])
    mask = (jnp.arange(T2)[None, None, :] < lengths[:, None, None]).astype(jnp.float32)
    mask = jnp.broadcast_to(mask, (B, T1, T2))

    params = (
        *_torch_linear_init(keys[3], n_feat, n_feat),   # linear_q
        *_torch_linear_init(keys[4], n_feat, n_feat),   # linear_k
        *_torch_linear_init(keys[5], n_feat, n_feat),   # linear_v
        *_torch_linear_init(keys[6], n_feat, n_feat),   # linear_out
    )

    out = multi_headed_attention(query, key_t, value, mask, params, n_head)
    out = jax.block_until_ready(out)

    ref = _reference(query, key_t, value, mask, params, n_head)
    # Kernel uses bf16 MXU inputs (f32 accumulation) + approx reciprocal, so compare
    # against the f32 reference with a bf16-appropriate tolerance.
    max_err = float(jnp.max(jnp.abs(out - ref)))
    if not jnp.allclose(out, ref, atol=5e-2, rtol=5e-2):
        raise AssertionError(f"Pallas output does not match reference (max abs err {max_err})")

    print("KERNEL_OK")
</pallas_src>

<mosaic_0001>
module attributes {stable_mosaic.version = 11 : i64} {
  func.func @mha_kernel(%arg0: i32, %arg1: i32, %arg2: memref<1x8x32xf32, #tpu.memory_space<vmem>>, %arg3: memref<1x8x32xf32, #tpu.memory_space<vmem>>, %arg4: memref<1x8x32xf32, #tpu.memory_space<vmem>>, %arg5: memref<1x8x8xf32, #tpu.memory_space<vmem>>, %arg6: memref<4x32x8xbf16, #tpu.memory_space<vmem>>, %arg7: memref<4x1x8xf32, #tpu.memory_space<vmem>>, %arg8: memref<4x32x8xbf16, #tpu.memory_space<vmem>>, %arg9: memref<4x1x8xf32, #tpu.memory_space<vmem>>, %arg10: memref<4x32x8xbf16, #tpu.memory_space<vmem>>, %arg11: memref<4x1x8xf32, #tpu.memory_space<vmem>>, %arg12: memref<4x8x32xbf16, #tpu.memory_space<vmem>>, %arg13: memref<1x32xf32, #tpu.memory_space<vmem>>, %arg14: memref<1x8x32xf32, #tpu.memory_space<vmem>>) attributes {dimension_semantics = [#tpu.dimension_semantics<parallel>, #tpu.dimension_semantics<parallel>], iteration_bounds = array<i64: 2, 1>, scalar_prefetch = 0 : i64, scratch_operands = 0 : i64, tpu.core_type = #tpu.core_type<tc>, window_params = [{transform_indices = @transform_0, window_bounds = array<i64: 1, 8, 32>}, {transform_indices = @transform_1, window_bounds = array<i64: 1, 8, 32>}, {transform_indices = @transform_2, window_bounds = array<i64: 1, 8, 32>}, {transform_indices = @transform_3, window_bounds = array<i64: 1, 8, 8>}, {pipeline_mode = #tpu.pipeline_mode<synchronous>, transform_indices = @transform_4, window_bounds = array<i64: 4, 32, 8>}, {pipeline_mode = #tpu.pipeline_mode<synchronous>, transform_indices = @transform_5, window_bounds = array<i64: 4, 1, 8>}, {pipeline_mode = #tpu.pipeline_mode<synchronous>, transform_indices = @transform_6, window_bounds = array<i64: 4, 32, 8>}, {pipeline_mode = #tpu.pipeline_mode<synchronous>, transform_indices = @transform_7, window_bounds = array<i64: 4, 1, 8>}, {pipeline_mode = #tpu.pipeline_mode<synchronous>, transform_indices = @transform_8, window_bounds = array<i64: 4, 32, 8>}, {pipeline_mode = #tpu.pipeline_mode<synchronous>, transform_indices = @transform_9, window_bounds = array<i64: 4, 1, 8>}, {pipeline_mode = #tpu.pipeline_mode<synchronous>, transform_indices = @transform_10, window_bounds = array<i64: 4, 8, 32>}, {pipeline_mode = #tpu.pipeline_mode<synchronous>, transform_indices = @transform_11, window_bounds = array<i64: 1, 32>}, {transform_indices = @transform_12, window_bounds = array<i64: 1, 8, 32>}]} {
    %c0 = arith.constant 0 : index
    %c0_0 = arith.constant 0 : index
    %c0_1 = arith.constant 0 : index
    %0 = vector.load %arg2[%c0, %c0_0, %c0_1] : memref<1x8x32xf32, #tpu.memory_space<vmem>>, vector<1x8x32xf32>
    %1 = vector.shape_cast %0 : vector<1x8x32xf32> to vector<8x32xf32>
    %2 = arith.truncf %1 : vector<8x32xf32> to vector<8x32xbf16>
    %c0_2 = arith.constant 0 : index
    %c0_3 = arith.constant 0 : index
    %c0_4 = arith.constant 0 : index
    %3 = vector.load %arg3[%c0_2, %c0_3, %c0_4] : memref<1x8x32xf32, #tpu.memory_space<vmem>>, vector<1x8x32xf32>
    %4 = vector.shape_cast %3 : vector<1x8x32xf32> to vector<8x32xf32>
    %5 = arith.truncf %4 : vector<8x32xf32> to vector<8x32xbf16>
    %c0_5 = arith.constant 0 : index
    %c0_6 = arith.constant 0 : index
    %c0_7 = arith.constant 0 : index
    %6 = vector.load %arg4[%c0_5, %c0_6, %c0_7] : memref<1x8x32xf32, #tpu.memory_space<vmem>>, vector<1x8x32xf32>
    %7 = vector.shape_cast %6 : vector<1x8x32xf32> to vector<8x32xf32>
    %8 = arith.truncf %7 : vector<8x32xf32> to vector<8x32xbf16>
    %c0_8 = arith.constant 0 : index
    %c0_9 = arith.constant 0 : index
    %c0_10 = arith.constant 0 : index
    %9 = vector.load %arg5[%c0_8, %c0_9, %c0_10] : memref<1x8x8xf32, #tpu.memory_space<vmem>>, vector<1x8x8xf32>
    %10 = vector.shape_cast %9 : vector<1x8x8xf32> to vector<8x8xf32>
    %cst = arith.constant 0.000000e+00 : f32
    %11 = vector.broadcast %cst : f32 to vector<8x8xf32>
    %12 = arith.cmpf oeq, %10, %11 : vector<8x8xf32>
    %cst_11 = arith.constant 0.000000e+00 : f32
    %13 = vector.broadcast %cst_11 : f32 to vector<8x32xf32>
    %c0_12 = arith.constant 0 : index
    %c0_13 = arith.constant 0 : index
    %c0_14 = arith.constant 0 : index
    %14 = vector.load %arg6[%c0_12, %c0_13, %c0_14] : memref<4x32x8xbf16, #tpu.memory_space<vmem>>, vector<1x32x8xbf16>
    %15 = vector.shape_cast %14 : vector<1x32x8xbf16> to vector<32x8xbf16>
    %cst_15 = arith.constant dense<0.000000e+00> : vector<8x8xf32>
    %16 = tpu.matmul %2, %15, %cst_15 {dimension_numbers = #tpu.dot_dimension_numbers<[1], [0], [0], [1], [0, 0, 1, 1], [], []>} : vector<8x32xbf16>, vector<32x8xbf16>, vector<8x8xf32> -> vector<8x8xf32>
    %c0_16 = arith.constant 0 : index
    %c0_17 = arith.constant 0 : index
    %c0_18 = arith.constant 0 : index
    %17 = vector.load %arg7[%c0_16, %c0_17, %c0_18] : memref<4x1x8xf32, #tpu.memory_space<vmem>>, vector<1x1x8xf32>
    %18 = vector.shape_cast %17 : vector<1x1x8xf32> to vector<1x8xf32>
    %19 = vector.broadcast %18 : vector<1x8xf32> to vector<8x8xf32>
    %20 = arith.addf %16, %19 : vector<8x8xf32>
    %c0_19 = arith.constant 0 : index
    %c0_20 = arith.constant 0 : index
    %c0_21 = arith.constant 0 : index
    %21 = vector.load %arg8[%c0_19, %c0_20, %c0_21] : memref<4x32x8xbf16, #tpu.memory_space<vmem>>, vector<1x32x8xbf16>
    %22 = vector.shape_cast %21 : vector<1x32x8xbf16> to vector<32x8xbf16>
    %cst_22 = arith.constant dense<0.000000e+00> : vector<8x8xf32>
    %23 = tpu.matmul %5, %22, %cst_22 {dimension_numbers = #tpu.dot_dimension_numbers<[1], [0], [0], [1], [0, 0, 1, 1], [], []>} : vector<8x32xbf16>, vector<32x8xbf16>, vector<8x8xf32> -> vector<8x8xf32>
    %c0_23 = arith.constant 0 : index
    %c0_24 = arith.constant 0 : index
    %c0_25 = arith.constant 0 : index
    %24 = vector.load %arg9[%c0_23, %c0_24, %c0_25] : memref<4x1x8xf32, #tpu.memory_space<vmem>>, vector<1x1x8xf32>
    %25 = vector.shape_cast %24 : vector<1x1x8xf32> to vector<1x8xf32>
    %26 = vector.broadcast %25 : vector<1x8xf32> to vector<8x8xf32>
    %27 = arith.addf %23, %26 : vector<8x8xf32>
    %c0_26 = arith.constant 0 : index
    %c0_27 = arith.constant 0 : index
    %c0_28 = arith.constant 0 : index
    %28 = vector.load %arg10[%c0_26, %c0_27, %c0_28] : memref<4x32x8xbf16, #tpu.memory_space<vmem>>, vector<1x32x8xbf16>
    %29 = vector.shape_cast %28 : vector<1x32x8xbf16> to vector<32x8xbf16>
    %cst_29 = arith.constant dense<0.000000e+00> : vector<8x8xf32>
    %30 = tpu.matmul %8, %29, %cst_29 {dimension_numbers = #tpu.dot_dimension_numbers<[1], [0], [0], [1], [0, 0, 1, 1], [], []>} : vector<8x32xbf16>, vector<32x8xbf16>, vector<8x8xf32> -> vector<8x8xf32>
    %c0_30 = arith.constant 0 : index
    %c0_31 = arith.constant 0 : index
    %c0_32 = arith.constant 0 : index
    %31 = vector.load %arg11[%c0_30, %c0_31, %c0_32] : memref<4x1x8xf32, #tpu.memory_space<vmem>>, vector<1x1x8xf32>
    %32 = vector.shape_cast %31 : vector<1x1x8xf32> to vector<1x8xf32>
    %33 = vector.broadcast %32 : vector<1x8xf32> to vector<8x8xf32>
    %34 = arith.addf %30, %33 : vector<8x8xf32>
    %35 = arith.truncf %20 : vector<8x8xf32> to vector<8x8xbf16>
    %36 = arith.truncf %27 : vector<8x8xf32> to vector<8x8xbf16>
    %cst_33 = arith.constant dense<0.000000e+00> : vector<8x8xf32>
    %37 = tpu.matmul %35, %36, %cst_33 {dimension_numbers = #tpu.dot_dimension_numbers<[1], [1], [0], [0], [0, 0, 1, 0], [], []>} : vector<8x8xbf16>, vector<8x8xbf16>, vector<8x8xf32> -> vector<8x8xf32>
    %cst_34 = arith.constant -3.40282347E+38 : f32
    %38 = vector.broadcast %cst_34 : f32 to vector<8x8xf32>
    %39 = arith.select %12, %38, %37 : vector<8x8xi1>, vector<8x8xf32>
    %cst_35 = arith.constant dense<0xFF800000> : vector<8xf32>
    %40 = vector.multi_reduction <maximumf>, %39, %cst_35 [1] : vector<8x8xf32> to vector<8xf32>
    %41 = vector.shape_cast %40 : vector<8xf32> to vector<8x1xf32>
    %42 = vector.broadcast %41 : vector<8x1xf32> to vector<8x8xf32>
    %43 = arith.subf %39, %42 : vector<8x8xf32>
    %44 = math.exp %43 : vector<8x8xf32>
    %cst_36 = arith.constant dense<0.000000e+00> : vector<8xf32>
    %45 = vector.multi_reduction <add>, %44, %cst_36 [1] : vector<8x8xf32> to vector<8xf32>
    %46 = vector.shape_cast %45 : vector<8xf32> to vector<8x1xf32>
    %47 = tpu.reciprocal %46 {approx = true} : vector<8x1xf32> -> vector<8x1xf32>
    %48 = vector.broadcast %47 : vector<8x1xf32> to vector<8x8xf32>
    %49 = arith.mulf %44, %48 : vector<8x8xf32>
    %cst_37 = arith.constant 0.000000e+00 : f32
    %50 = vector.broadcast %cst_37 : f32 to vector<8x8xf32>
    %51 = arith.select %12, %50, %49 : vector<8x8xi1>, vector<8x8xf32>
    %52 = arith.truncf %51 : vector<8x8xf32> to vector<8x8xbf16>
    %53 = arith.truncf %34 : vector<8x8xf32> to vector<8x8xbf16>
    %cst_38 = arith.constant dense<0.000000e+00> : vector<8x8xf32>
    %54 = tpu.matmul %52, %53, %cst_38 {dimension_numbers = #tpu.dot_dimension_numbers<[1], [0], [0], [1], [0, 0, 1, 1], [], []>} : vector<8x8xbf16>, vector<8x8xbf16>, vector<8x8xf32> -> vector<8x8xf32>
    %55 = arith.truncf %54 : vector<8x8xf32> to vector<8x8xbf16>
    %c0_39 = arith.constant 0 : index
    %c0_40 = arith.constant 0 : index
    %c0_41 = arith.constant 0 : index
    %56 = vector.load %arg12[%c0_39, %c0_40, %c0_41] : memref<4x8x32xbf16, #tpu.memory_space<vmem>>, vector<1x8x32xbf16>
    %57 = vector.shape_cast %56 : vector<1x8x32xbf16> to vector<8x32xbf16>
    %cst_42 = arith.constant dense<0.000000e+00> : vector<8x32xf32>
    %58 = tpu.matmul %55, %57, %cst_42 {dimension_numbers = #tpu.dot_dimension_numbers<[1], [0], [0], [1], [0, 0, 1, 1], [], []>} : vector<8x8xbf16>, vector<8x32xbf16>, vector<8x32xf32> -> vector<8x32xf32>
    %59 = arith.addf %13, %58 : vector<8x32xf32>
    %c1 = arith.constant 1 : index
    %c0_43 = arith.constant 0 : index
    %c0_44 = arith.constant 0 : index
    %60 = vector.load %arg6[%c1, %c0_43, %c0_44] : memref<4x32x8xbf16, #tpu.memory_space<vmem>>, vector<1x32x8xbf16>
    %61 = vector.shape_cast %60 : vector<1x32x8xbf16> to vector<32x8xbf16>
    %cst_45 = arith.constant dense<0.000000e+00> : vector<8x8xf32>
    %62 = tpu.matmul %2, %61, %cst_45 {dimension_numbers = #tpu.dot_dimension_numbers<[1], [0], [0], [1], [0, 0, 1, 1], [], []>} : vector<8x32xbf16>, vector<32x8xbf16>, vector<8x8xf32> -> vector<8x8xf32>
    %c1_46 = arith.constant 1 : index
    %c0_47 = arith.constant 0 : index
    %c0_48 = arith.constant 0 : index
    %63 = vector.load %arg7[%c1_46, %c0_47, %c0_48] : memref<4x1x8xf32, #tpu.memory_space<vmem>>, vector<1x1x8xf32>
    %64 = vector.shape_cast %63 : vector<1x1x8xf32> to vector<1x8xf32>
    %65 = vector.broadcast %64 : vector<1x8xf32> to vector<8x8xf32>
    %66 = arith.addf %62, %65 : vector<8x8xf32>
    %c1_49 = arith.constant 1 : index
    %c0_50 = arith.constant 0 : index
    %c0_51 = arith.constant 0 : index
    %67 = vector.load %arg8[%c1_49, %c0_50, %c0_51] : memref<4x32x8xbf16, #tpu.memory_space<vmem>>, vector<1x32x8xbf16>
    %68 = vector.shape_cast %67 : vector<1x32x8xbf16> to vector<32x8xbf16>
    %cst_52 = arith.constant dense<0.000000e+00> : vector<8x8xf32>
    %69 = tpu.matmul %5, %68, %cst_52 {dimension_numbers = #tpu.dot_dimension_numbers<[1], [0], [0], [1], [0, 0, 1, 1], [], []>} : vector<8x32xbf16>, vector<32x8xbf16>, vector<8x8xf32> -> vector<8x8xf32>
    %c1_53 = arith.constant 1 : index
    %c0_54 = arith.constant 0 : index
    %c0_55 = arith.constant 0 : index
    %70 = vector.load %arg9[%c1_53, %c0_54, %c0_55] : memref<4x1x8xf32, #tpu.memory_space<vmem>>, vector<1x1x8xf32>
    %71 = vector.shape_cast %70 : vector<1x1x8xf32> to vector<1x8xf32>
    %72 = vector.broadcast %71 : vector<1x8xf32> to vector<8x8xf32>
    %73 = arith.addf %69, %72 : vector<8x8xf32>
    %c1_56 = arith.constant 1 : index
    %c0_57 = arith.constant 0 : index
    %c0_58 = arith.constant 0 : index
    %74 = vector.load %arg10[%c1_56, %c0_57, %c0_58] : memref<4x32x8xbf16, #tpu.memory_space<vmem>>, vector<1x32x8xbf16>
    %75 = vector.shape_cast %74 : vector<1x32x8xbf16> to vector<32x8xbf16>
    %cst_59 = arith.constant dense<0.000000e+00> : vector<8x8xf32>
    %76 = tpu.matmul %8, %75, %cst_59 {dimension_numbers = #tpu.dot_dimension_numbers<[1], [0], [0], [1], [0, 0, 1, 1], [], []>} : vector<8x32xbf16>, vector<32x8xbf16>, vector<8x8xf32> -> vector<8x8xf32>
    %c1_60 = arith.constant 1 : index
    %c0_61 = arith.constant 0 : index
    %c0_62 = arith.constant 0 : index
    %77 = vector.load %arg11[%c1_60, %c0_61, %c0_62] : memref<4x1x8xf32, #tpu.memory_space<vmem>>, vector<1x1x8xf32>
    %78 = vector.shape_cast %77 : vector<1x1x8xf32> to vector<1x8xf32>
    %79 = vector.broadcast %78 : vector<1x8xf32> to vector<8x8xf32>
    %80 = arith.addf %76, %79 : vector<8x8xf32>
    %81 = arith.truncf %66 : vector<8x8xf32> to vector<8x8xbf16>
    %82 = arith.truncf %73 : vector<8x8xf32> to vector<8x8xbf16>
    %cst_63 = arith.constant dense<0.000000e+00> : vector<8x8xf32>
    %83 = tpu.matmul %81, %82, %cst_63 {dimension_numbers = #tpu.dot_dimension_numbers<[1], [1], [0], [0], [0, 0, 1, 0], [], []>} : vector<8x8xbf16>, vector<8x8xbf16>, vector<8x8xf32> -> vector<8x8xf32>
    %cst_64 = arith.constant -3.40282347E+38 : f32
    %84 = vector.broadcast %cst_64 : f32 to vector<8x8xf32>
    %85 = arith.select %12, %84, %83 : vector<8x8xi1>, vector<8x8xf32>
    %cst_65 = arith.constant dense<0xFF800000> : vector<8xf32>
    %86 = vector.multi_reduction <maximumf>, %85, %cst_65 [1] : vector<8x8xf32> to vector<8xf32>
    %87 = vector.shape_cast %86 : vector<8xf32> to vector<8x1xf32>
    %88 = vector.broadcast %87 : vector<8x1xf32> to vector<8x8xf32>
    %89 = arith.subf %85, %88 : vector<8x8xf32>
    %90 = math.exp %89 : vector<8x8xf32>
    %cst_66 = arith.constant dense<0.000000e+00> : vector<8xf32>
    %91 = vector.multi_reduction <add>, %90, %cst_66 [1] : vector<8x8xf32> to vector<8xf32>
    %92 = vector.shape_cast %91 : vector<8xf32> to vector<8x1xf32>
    %93 = tpu.reciprocal %92 {approx = true} : vector<8x1xf32> -> vector<8x1xf32>
    %94 = vector.broadcast %93 : vector<8x1xf32> to vector<8x8xf32>
    %95 = arith.mulf %90, %94 : vector<8x8xf32>
    %cst_67 = arith.constant 0.000000e+00 : f32
    %96 = vector.broadcast %cst_67 : f32 to vector<8x8xf32>
    %97 = arith.select %12, %96, %95 : vector<8x8xi1>, vector<8x8xf32>
    %98 = arith.truncf %97 : vector<8x8xf32> to vector<8x8xbf16>
    %99 = arith.truncf %80 : vector<8x8xf32> to vector<8x8xbf16>
    %cst_68 = arith.constant dense<0.000000e+00> : vector<8x8xf32>
    %100 = tpu.matmul %98, %99, %cst_68 {dimension_numbers = #tpu.dot_dimension_numbers<[1], [0], [0], [1], [0, 0, 1, 1], [], []>} : vector<8x8xbf16>, vector<8x8xbf16>, vector<8x8xf32> -> vector<8x8xf32>
    %101 = arith.truncf %100 : vector<8x8xf32> to vector<8x8xbf16>
    %c1_69 = arith.constant 1 : index
    %c0_70 = arith.constant 0 : index
    %c0_71 = arith.constant 0 : index
    %102 = vector.load %arg12[%c1_69, %c0_70, %c0_71] : memref<4x8x32xbf16, #tpu.memory_space<vmem>>, vector<1x8x32xbf16>
    %103 = vector.shape_cast %102 : vector<1x8x32xbf16> to vector<8x32xbf16>
    %cst_72 = arith.constant dense<0.000000e+00> : vector<8x32xf32>
    %104 = tpu.matmul %101, %103, %cst_72 {dimension_numbers = #tpu.dot_dimension_numbers<[1], [0], [0], [1], [0, 0, 1, 1], [], []>} : vector<8x8xbf16>, vector<8x32xbf16>, vector<8x32xf32> -> vector<8x32xf32>
    %105 = arith.addf %59, %104 : vector<8x32xf32>
    %c2 = arith.constant 2 : index
    %c0_73 = arith.constant 0 : index
    %c0_74 = arith.constant 0 : index
    %106 = vector.load %arg6[%c2, %c0_73, %c0_74] : memref<4x32x8xbf16, #tpu.memory_space<vmem>>, vector<1x32x8xbf16>
    %107 = vector.shape_cast %106 : vector<1x32x8xbf16> to vector<32x8xbf16>
    %cst_75 = arith.constant dense<0.000000e+00> : vector<8x8xf32>
    %108 = tpu.matmul %2, %107, %cst_75 {dimension_numbers = #tpu.dot_dimension_numbers<[1], [0], [0], [1], [0, 0, 1, 1], [], []>} : vector<8x32xbf16>, vector<32x8xbf16>, vector<8x8xf32> -> vector<8x8xf32>
    %c2_76 = arith.constant 2 : index
    %c0_77 = arith.constant 0 : index
    %c0_78 = arith.constant 0 : index
    %109 = vector.load %arg7[%c2_76, %c0_77, %c0_78] : memref<4x1x8xf32, #tpu.memory_space<vmem>>, vector<1x1x8xf32>
    %110 = vector.shape_cast %109 : vector<1x1x8xf32> to vector<1x8xf32>
    %111 = vector.broadcast %110 : vector<1x8xf32> to vector<8x8xf32>
    %112 = arith.addf %108, %111 : vector<8x8xf32>
    %c2_79 = arith.constant 2 : index
    %c0_80 = arith.constant 0 : index
    %c0_81 = arith.constant 0 : index
    %113 = vector.load %arg8[%c2_79, %c0_80, %c0_81] : memref<4x32x8xbf16, #tpu.memory_space<vmem>>, vector<1x32x8xbf16>
    %114 = vector.shape_cast %113 : vector<1x32x8xbf16> to vector<32x8xbf16>
    %cst_82 = arith.constant dense<0.000000e+00> : vector<8x8xf32>
    %115 = tpu.matmul %5, %114, %cst_82 {dimension_numbers = #tpu.dot_dimension_numbers<[1], [0], [0], [1], [0, 0, 1, 1], [], []>} : vector<8x32xbf16>, vector<32x8xbf16>, vector<8x8xf32> -> vector<8x8xf32>
    %c2_83 = arith.constant 2 : index
    %c0_84 = arith.constant 0 : index
    %c0_85 = arith.constant 0 : index
    %116 = vector.load %arg9[%c2_83, %c0_84, %c0_85] : memref<4x1x8xf32, #tpu.memory_space<vmem>>, vector<1x1x8xf32>
    %117 = vector.shape_cast %116 : vector<1x1x8xf32> to vector<1x8xf32>
    %118 = vector.broadcast %117 : vector<1x8xf32> to vector<8x8xf32>
    %119 = arith.addf %115, %118 : vector<8x8xf32>
    %c2_86 = arith.constant 2 : index
    %c0_87 = arith.constant 0 : index
    %c0_88 = arith.constant 0 : index
    %120 = vector.load %arg10[%c2_86, %c0_87, %c0_88] : memref<4x32x8xbf16, #tpu.memory_space<vmem>>, vector<1x32x8xbf16>
    %121 = vector.shape_cast %120 : vector<1x32x8xbf16> to vector<32x8xbf16>
    %cst_89 = arith.constant dense<0.000000e+00> : vector<8x8xf32>
    %122 = tpu.matmul %8, %121, %cst_89 {dimension_numbers = #tpu.dot_dimension_numbers<[1], [0], [0], [1], [0, 0, 1, 1], [], []>} : vector<8x32xbf16>, vector<32x8xbf16>, vector<8x8xf32> -> vector<8x8xf32>
    %c2_90 = arith.constant 2 : index
    %c0_91 = arith.constant 0 : index
    %c0_92 = arith.constant 0 : index
    %123 = vector.load %arg11[%c2_90, %c0_91, %c0_92] : memref<4x1x8xf32, #tpu.memory_space<vmem>>, vector<1x1x8xf32>
    %124 = vector.shape_cast %123 : vector<1x1x8xf32> to vector<1x8xf32>
    %125 = vector.broadcast %124 : vector<1x8xf32> to vector<8x8xf32>
    %126 = arith.addf %122, %125 : vector<8x8xf32>
    %127 = arith.truncf %112 : vector<8x8xf32> to vector<8x8xbf16>
    %128 = arith.truncf %119 : vector<8x8xf32> to vector<8x8xbf16>
    %cst_93 = arith.constant dense<0.000000e+00> : vector<8x8xf32>
    %129 = tpu.matmul %127, %128, %cst_93 {dimension_numbers = #tpu.dot_dimension_numbers<[1], [1], [0], [0], [0, 0, 1, 0], [], []>} : vector<8x8xbf16>, vector<8x8xbf16>, vector<8x8xf32> -> vector<8x8xf32>
    %cst_94 = arith.constant -3.40282347E+38 : f32
    %130 = vector.broadcast %cst_94 : f32 to vector<8x8xf32>
    %131 = arith.select %12, %130, %129 : vector<8x8xi1>, vector<8x8xf32>
    %cst_95 = arith.constant dense<0xFF800000> : vector<8xf32>
    %132 = vector.multi_reduction <maximumf>, %131, %cst_95 [1] : vector<8x8xf32> to vector<8xf32>
    %133 = vector.shape_cast %132 : vector<8xf32> to vector<8x1xf32>
    %134 = vector.broadcast %133 : vector<8x1xf32> to vector<8x8xf32>
    %135 = arith.subf %131, %134 : vector<8x8xf32>
    %136 = math.exp %135 : vector<8x8xf32>
    %cst_96 = arith.constant dense<0.000000e+00> : vector<8xf32>
    %137 = vector.multi_reduction <add>, %136, %cst_96 [1] : vector<8x8xf32> to vector<8xf32>
    %138 = vector.shape_cast %137 : vector<8xf32> to vector<8x1xf32>
    %139 = tpu.reciprocal %138 {approx = true} : vector<8x1xf32> -> vector<8x1xf32>
    %140 = vector.broadcast %139 : vector<8x1xf32> to vector<8x8xf32>
    %141 = arith.mulf %136, %140 : vector<8x8xf32>
    %cst_97 = arith.constant 0.000000e+00 : f32
    %142 = vector.broadcast %cst_97 : f32 to vector<8x8xf32>
    %143 = arith.select %12, %142, %141 : vector<8x8xi1>, vector<8x8xf32>
    %144 = arith.truncf %143 : vector<8x8xf32> to vector<8x8xbf16>
    %145 = arith.truncf %126 : vector<8x8xf32> to vector<8x8xbf16>
    %cst_98 = arith.constant dense<0.000000e+00> : vector<8x8xf32>
    %146 = tpu.matmul %144, %145, %cst_98 {dimension_numbers = #tpu.dot_dimension_numbers<[1], [0], [0], [1], [0, 0, 1, 1], [], []>} : vector<8x8xbf16>, vector<8x8xbf16>, vector<8x8xf32> -> vector<8x8xf32>
    %147 = arith.truncf %146 : vector<8x8xf32> to vector<8x8xbf16>
    %c2_99 = arith.constant 2 : index
    %c0_100 = arith.constant 0 : index
    %c0_101 = arith.constant 0 : index
    %148 = vector.load %arg12[%c2_99, %c0_100, %c0_101] : memref<4x8x32xbf16, #tpu.memory_space<vmem>>, vector<1x8x32xbf16>
    %149 = vector.shape_cast %148 : vector<1x8x32xbf16> to vector<8x32xbf16>
    %cst_102 = arith.constant dense<0.000000e+00> : vector<8x32xf32>
    %150 = tpu.matmul %147, %149, %cst_102 {dimension_numbers = #tpu.dot_dimension_numbers<[1], [0], [0], [1], [0, 0, 1, 1], [], []>} : vector<8x8xbf16>, vector<8x32xbf16>, vector<8x32xf32> -> vector<8x32xf32>
    %151 = arith.addf %105, %150 : vector<8x32xf32>
    %c3 = arith.constant 3 : index
    %c0_103 = arith.constant 0 : index
    %c0_104 = arith.constant 0 : index
    %152 = vector.load %arg6[%c3, %c0_103, %c0_104] : memref<4x32x8xbf16, #tpu.memory_space<vmem>>, vector<1x32x8xbf16>
    %153 = vector.shape_cast %152 : vector<1x32x8xbf16> to vector<32x8xbf16>
    %cst_105 = arith.constant dense<0.000000e+00> : vector<8x8xf32>
    %154 = tpu.matmul %2, %153, %cst_105 {dimension_numbers = #tpu.dot_dimension_numbers<[1], [0], [0], [1], [0, 0, 1, 1], [], []>} : vector<8x32xbf16>, vector<32x8xbf16>, vector<8x8xf32> -> vector<8x8xf32>
    %c3_106 = arith.constant 3 : index
    %c0_107 = arith.constant 0 : index
    %c0_108 = arith.constant 0 : index
    %155 = vector.load %arg7[%c3_106, %c0_107, %c0_108] : memref<4x1x8xf32, #tpu.memory_space<vmem>>, vector<1x1x8xf32>
    %156 = vector.shape_cast %155 : vector<1x1x8xf32> to vector<1x8xf32>
    %157 = vector.broadcast %156 : vector<1x8xf32> to vector<8x8xf32>
    %158 = arith.addf %154, %157 : vector<8x8xf32>
    %c3_109 = arith.constant 3 : index
    %c0_110 = arith.constant 0 : index
    %c0_111 = arith.constant 0 : index
    %159 = vector.load %arg8[%c3_109, %c0_110, %c0_111] : memref<4x32x8xbf16, #tpu.memory_space<vmem>>, vector<1x32x8xbf16>
    %160 = vector.shape_cast %159 : vector<1x32x8xbf16> to vector<32x8xbf16>
    %cst_112 = arith.constant dense<0.000000e+00> : vector<8x8xf32>
    %161 = tpu.matmul %5, %160, %cst_112 {dimension_numbers = #tpu.dot_dimension_numbers<[1], [0], [0], [1], [0, 0, 1, 1], [], []>} : vector<8x32xbf16>, vector<32x8xbf16>, vector<8x8xf32> -> vector<8x8xf32>
    %c3_113 = arith.constant 3 : index
    %c0_114 = arith.constant 0 : index
    %c0_115 = arith.constant 0 : index
    %162 = vector.load %arg9[%c3_113, %c0_114, %c0_115] : memref<4x1x8xf32, #tpu.memory_space<vmem>>, vector<1x1x8xf32>
    %163 = vector.shape_cast %162 : vector<1x1x8xf32> to vector<1x8xf32>
    %164 = vector.broadcast %163 : vector<1x8xf32> to vector<8x8xf32>
    %165 = arith.addf %161, %164 : vector<8x8xf32>
    %c3_116 = arith.constant 3 : index
    %c0_117 = arith.constant 0 : index
    %c0_118 = arith.constant 0 : index
    %166 = vector.load %arg10[%c3_116, %c0_117, %c0_118] : memref<4x32x8xbf16, #tpu.memory_space<vmem>>, vector<1x32x8xbf16>
    %167 = vector.shape_cast %166 : vector<1x32x8xbf16> to vector<32x8xbf16>
    %cst_119 = arith.constant dense<0.000000e+00> : vector<8x8xf32>
    %168 = tpu.matmul %8, %167, %cst_119 {dimension_numbers = #tpu.dot_dimension_numbers<[1], [0], [0], [1], [0, 0, 1, 1], [], []>} : vector<8x32xbf16>, vector<32x8xbf16>, vector<8x8xf32> -> vector<8x8xf32>
    %c3_120 = arith.constant 3 : index
    %c0_121 = arith.constant 0 : index
    %c0_122 = arith.constant 0 : index
    %169 = vector.load %arg11[%c3_120, %c0_121, %c0_122] : memref<4x1x8xf32, #tpu.memory_space<vmem>>, vector<1x1x8xf32>
    %170 = vector.shape_cast %169 : vector<1x1x8xf32> to vector<1x8xf32>
    %171 = vector.broadcast %170 : vector<1x8xf32> to vector<8x8xf32>
    %172 = arith.addf %168, %171 : vector<8x8xf32>
    %173 = arith.truncf %158 : vector<8x8xf32> to vector<8x8xbf16>
    %174 = arith.truncf %165 : vector<8x8xf32> to vector<8x8xbf16>
    %cst_123 = arith.constant dense<0.000000e+00> : vector<8x8xf32>
    %175 = tpu.matmul %173, %174, %cst_123 {dimension_numbers = #tpu.dot_dimension_numbers<[1], [1], [0], [0], [0, 0, 1, 0], [], []>} : vector<8x8xbf16>, vector<8x8xbf16>, vector<8x8xf32> -> vector<8x8xf32>
    %cst_124 = arith.constant -3.40282347E+38 : f32
    %176 = vector.broadcast %cst_124 : f32 to vector<8x8xf32>
    %177 = arith.select %12, %176, %175 : vector<8x8xi1>, vector<8x8xf32>
    %cst_125 = arith.constant dense<0xFF800000> : vector<8xf32>
    %178 = vector.multi_reduction <maximumf>, %177, %cst_125 [1] : vector<8x8xf32> to vector<8xf32>
    %179 = vector.shape_cast %178 : vector<8xf32> to vector<8x1xf32>
    %180 = vector.broadcast %179 : vector<8x1xf32> to vector<8x8xf32>
    %181 = arith.subf %177, %180 : vector<8x8xf32>
    %182 = math.exp %181 : vector<8x8xf32>
    %cst_126 = arith.constant dense<0.000000e+00> : vector<8xf32>
    %183 = vector.multi_reduction <add>, %182, %cst_126 [1] : vector<8x8xf32> to vector<8xf32>
    %184 = vector.shape_cast %183 : vector<8xf32> to vector<8x1xf32>
    %185 = tpu.reciprocal %184 {approx = true} : vector<8x1xf32> -> vector<8x1xf32>
    %186 = vector.broadcast %185 : vector<8x1xf32> to vector<8x8xf32>
    %187 = arith.mulf %182, %186 : vector<8x8xf32>
    %cst_127 = arith.constant 0.000000e+00 : f32
    %188 = vector.broadcast %cst_127 : f32 to vector<8x8xf32>
    %189 = arith.select %12, %188, %187 : vector<8x8xi1>, vector<8x8xf32>
    %190 = arith.truncf %189 : vector<8x8xf32> to vector<8x8xbf16>
    %191 = arith.truncf %172 : vector<8x8xf32> to vector<8x8xbf16>
    %cst_128 = arith.constant dense<0.000000e+00> : vector<8x8xf32>
    %192 = tpu.matmul %190, %191, %cst_128 {dimension_numbers = #tpu.dot_dimension_numbers<[1], [0], [0], [1], [0, 0, 1, 1], [], []>} : vector<8x8xbf16>, vector<8x8xbf16>, vector<8x8xf32> -> vector<8x8xf32>
    %193 = arith.truncf %192 : vector<8x8xf32> to vector<8x8xbf16>
    %c3_129 = arith.constant 3 : index
    %c0_130 = arith.constant 0 : index
    %c0_131 = arith.constant 0 : index
    %194 = vector.load %arg12[%c3_129, %c0_130, %c0_131] : memref<4x8x32xbf16, #tpu.memory_space<vmem>>, vector<1x8x32xbf16>
    %195 = vector.shape_cast %194 : vector<1x8x32xbf16> to vector<8x32xbf16>
    %cst_132 = arith.constant dense<0.000000e+00> : vector<8x32xf32>
    %196 = tpu.matmul %193, %195, %cst_132 {dimension_numbers = #tpu.dot_dimension_numbers<[1], [0], [0], [1], [0, 0, 1, 1], [], []>} : vector<8x8xbf16>, vector<8x32xbf16>, vector<8x32xf32> -> vector<8x32xf32>
    %197 = arith.addf %151, %196 : vector<8x32xf32>
    %c0_133 = arith.constant 0 : index
    %c0_134 = arith.constant 0 : index
    %198 = vector.load %arg13[%c0_133, %c0_134] : memref<1x32xf32, #tpu.memory_space<vmem>>, vector<1x32xf32>
    %199 = vector.broadcast %198 : vector<1x32xf32> to vector<8x32xf32>
    %200 = arith.addf %197, %199 : vector<8x32xf32>
    %c0_135 = arith.constant 0 : index
    %c0_136 = arith.constant 0 : index
    %c0_137 = arith.constant 0 : index
    %201 = vector.load %arg14[%c0_135, %c0_136, %c0_137] : memref<1x8x32xf32, #tpu.memory_space<vmem>>, vector<1x8x32xf32>
    %202 = vector.shape_cast %201 : vector<1x8x32xf32> to vector<8x32xf32>
    %203 = vector.shape_cast %200 : vector<8x32xf32> to vector<1x8x32xf32>
    tpu.vector_store %arg14[%c0_135, %c0_136, %c0_137], %203 {strides = array<i32>} : memref<1x8x32xf32, #tpu.memory_space<vmem>>, vector<1x8x32xf32>,
    return
  }
  func.func @transform_0(%arg0: i32, %arg1: i32) -> (i32, i32, i32) {
    %c0_i32 = arith.constant 0 : i32
    %c0_i32_0 = arith.constant 0 : i32
    return %arg0, %arg1, %c0_i32 : i32, i32, i32
  }
  func.func @transform_1(%arg0: i32, %arg1: i32) -> (i32, i32, i32) {
    %c0_i32 = arith.constant 0 : i32
    %c0_i32_0 = arith.constant 0 : i32
    %c0_i32_1 = arith.constant 0 : i32
    return %arg0, %c0_i32, %c0_i32_0 : i32, i32, i32
  }
  func.func @transform_2(%arg0: i32, %arg1: i32) -> (i32, i32, i32) {
    %c0_i32 = arith.constant 0 : i32
    %c0_i32_0 = arith.constant 0 : i32
    %c0_i32_1 = arith.constant 0 : i32
    return %arg0, %c0_i32, %c0_i32_0 : i32, i32, i32
  }
  func.func @transform_3(%arg0: i32, %arg1: i32) -> (i32, i32, i32) {
    %c0_i32 = arith.constant 0 : i32
    %c0_i32_0 = arith.constant 0 : i32
    return %arg0, %arg1, %c0_i32 : i32, i32, i32
  }
  func.func @transform_4(%arg0: i32, %arg1: i32) -> (i32, i32, i32) {
    %c0_i32 = arith.constant 0 : i32
    %c0_i32_0 = arith.constant 0 : i32
    %c0_i32_1 = arith.constant 0 : i32
    %c0_i32_2 = arith.constant 0 : i32
    return %c0_i32, %c0_i32_0, %c0_i32_1 : i32, i32, i32
  }
  func.func @transform_5(%arg0: i32, %arg1: i32) -> (i32, i32, i32) {
    %c0_i32 = arith.constant 0 : i32
    %c0_i32_0 = arith.constant 0 : i32
    %c0_i32_1 = arith.constant 0 : i32
    %c0_i32_2 = arith.constant 0 : i32
    return %c0_i32, %c0_i32_0, %c0_i32_1 : i32, i32, i32
  }
  func.func @transform_6(%arg0: i32, %arg1: i32) -> (i32, i32, i32) {
    %c0_i32 = arith.constant 0 : i32
    %c0_i32_0 = arith.constant 0 : i32
    %c0_i32_1 = arith.constant 0 : i32
    %c0_i32_2 = arith.constant 0 : i32
    return %c0_i32, %c0_i32_0, %c0_i32_1 : i32, i32, i32
  }
  func.func @transform_7(%arg0: i32, %arg1: i32) -> (i32, i32, i32) {
    %c0_i32 = arith.constant 0 : i32
    %c0_i32_0 = arith.constant 0 : i32
    %c0_i32_1 = arith.constant 0 : i32
    %c0_i32_2 = arith.constant 0 : i32
    return %c0_i32, %c0_i32_0, %c0_i32_1 : i32, i32, i32
  }
  func.func @transform_8(%arg0: i32, %arg1: i32) -> (i32, i32, i32) {
    %c0_i32 = arith.constant 0 : i32
    %c0_i32_0 = arith.constant 0 : i32
    %c0_i32_1 = arith.constant 0 : i32
    %c0_i32_2 = arith.constant 0 : i32
    return %c0_i32, %c0_i32_0, %c0_i32_1 : i32, i32, i32
  }
  func.func @transform_9(%arg0: i32, %arg1: i32) -> (i32, i32, i32) {
    %c0_i32 = arith.constant 0 : i32
    %c0_i32_0 = arith.constant 0 : i32
    %c0_i32_1 = arith.constant 0 : i32
    %c0_i32_2 = arith.constant 0 : i32
    return %c0_i32, %c0_i32_0, %c0_i32_1 : i32, i32, i32
  }
  func.func @transform_10(%arg0: i32, %arg1: i32) -> (i32, i32, i32) {
    %c0_i32 = arith.constant 0 : i32
    %c0_i32_0 = arith.constant 0 : i32
    %c0_i32_1 = arith.constant 0 : i32
    %c0_i32_2 = arith.constant 0 : i32
    return %c0_i32, %c0_i32_0, %c0_i32_1 : i32, i32, i32
  }
  func.func @transform_11(%arg0: i32, %arg1: i32) -> (i32, i32) {
    %c0_i32 = arith.constant 0 : i32
    %c0_i32_0 = arith.constant 0 : i32
    %c0_i32_1 = arith.constant 0 : i32
    return %c0_i32, %c0_i32_0 : i32, i32
  }
  func.func @transform_12(%arg0: i32, %arg1: i32) -> (i32, i32, i32) {
    %c0_i32 = arith.constant 0 : i32
    %c0_i32_0 = arith.constant 0 : i32
    return %arg0, %arg1, %c0_i32 : i32, i32, i32
  }
}

</mosaic_0001>

<llo_original>
// kernel: tpu_custom_call.1
$region0: #{tpu_custom_call.1}
  #allocation0 [shape = 'u32[]', space=smem, size = 0x4, offset = 0x4, fixed_abs, tag = 'smem constant byte address 0x4 - core index']
  #allocation1 [shape = 'u32[72,128]{1,0:T(1,128)}', space=vmem, size = 0x9000, scoped, tag = 'internal scratch']
  %s0 = inlined_call_operand.vmem [shape: f32[2,8,32], index: 0, kind: input, shape index: {}]
  %s1 = inlined_call_operand.vmem [shape: f32[2,8,32], index: 1, kind: input, shape index: {}]
  %s2 = inlined_call_operand.vmem [shape: f32[2,8,32], index: 2, kind: input, shape index: {}]
  %s3 = inlined_call_operand.vmem [shape: f32[2,8,8], index: 3, kind: input, shape index: {}]
  %s4 = inlined_call_operand.vmem [shape: bf16[4,32,8], index: 4, kind: input, shape index: {}]
  %s5 = inlined_call_operand.vmem [shape: f32[4,1,8], index: 5, kind: input, shape index: {}]
  %s6 = inlined_call_operand.vmem [shape: bf16[4,32,8], index: 6, kind: input, shape index: {}]
  %s7 = inlined_call_operand.vmem [shape: f32[4,1,8], index: 7, kind: input, shape index: {}]
  %s8 = inlined_call_operand.vmem [shape: bf16[4,32,8], index: 8, kind: input, shape index: {}]
  %s9 = inlined_call_operand.vmem [shape: f32[4,1,8], index: 9, kind: input, shape index: {}]
  %s10 = inlined_call_operand.vmem [shape: bf16[4,8,32], index: 10, kind: input, shape index: {}]
  %s11 = inlined_call_operand.vmem [shape: f32[1,32], index: 11, kind: input, shape index: {}]
  %s12 = inlined_call_operand.hbm [shape: f32[2,8,32], index: 12, kind: output, shape index: {}]
  %s13 = sld [smem:[#allocation0]]
  $region81: #{tpu_custom_call.1} parent=0
    _
  %s15 = ssub.s32 1, %s13
  %s16 = scalar_select 0, %s15, %s13
  $region1: #{tpu_custom_call.1} parent=0
    #allocation2 [shape = 'u8[8192]{0}', space=vmem, size = 0x2000, scoped, tag = 'output window, operand 0']
    #allocation3 [shape = 's32[2]{0}', space=sflag, size = 0x8, scoped, tag = 'scoped memory for tpu_custom_call.1']
    %17 = vsyncpa [#allocation3], 0
    %s18 = scalar_lea.sflag [#allocation3], 1
    %19 = vsyncpa %s18, 0
    loop: start=0, step=1, limit=4
    $region2: #{tpu_custom_call.1} parent=1 // loop_pre_header
      _
    $region3: #{tpu_custom_call.1} parent=1 // loop_header
      %s21 = sphi 0, %s25
      %p22 = scmp.ge.s32.totalorder %s21, 4
      %s28 = sphi 0, %s40
      %s29 = sphi 0, %s36
      %s30 = sphi 0, %s28
      %s31 = sphi 0, %s29
      %s32 = sphi 0, %s30
      %s33 = sphi 0, %s31
      %s45 = sphi 0, %s47
      %s48 = sphi 0, %s45
      %s49 = sphi 0, %s48
      %s65 = sphi 0, %s49
      %s71 = sphi 0, %s73
      %s74 = sphi 0, %s71
      %s75 = sphi 0, %s74
      %s91 = sphi 0, %s75
      %s97 = sphi 0, %s99
      %s100 = sphi 0, %s97
      %s101 = sphi 0, %s100
      %s117 = sphi 0, %s101
      %s125 = sphi 0, %s127
      %s128 = sphi 0, %s125
      %s129 = sphi 0, %s128
      %s145 = sphi 0, %s129
      %s149 = sphi 0, %s149
      %s151 = sphi 0, %s149
      %s152 = sphi 0, %s151
      %s166 = sphi 0, %s152
      %s170 = sphi 0, %s170
      %s172 = sphi 0, %s170
      %s173 = sphi 0, %s172
      %s187 = sphi 0, %s173
      %s191 = sphi 0, %s191
      %s193 = sphi 0, %s191
      %s194 = sphi 0, %s193
      %s208 = sphi 0, %s194
      %s212 = sphi 0, %s212
      %s214 = sphi 0, %s212
      %s215 = sphi 0, %s214
      %s229 = sphi 0, %s215
      %s233 = sphi 0, %s233
      %s235 = sphi 0, %s233
      %s236 = sphi 0, %s235
      %s250 = sphi 0, %s236
      %s254 = sphi 0, %s254
      %s256 = sphi 0, %s254
      %s257 = sphi 0, %s256
      %s271 = sphi 0, %s257
      %s275 = sphi 0, %s275
      %s277 = sphi 0, %s275
      %s278 = sphi 0, %s277
      %s292 = sphi 0, %s278
      %s296 = sphi 0, %s296
      %s298 = sphi 0, %s296
      %s299 = sphi 0, %s298
      %s313 = sphi 0, %s299
      %s321 = sphi 0, %s323
      %s324 = sphi 0, %s321
      %s325 = sphi 0, %s324
      %s341 = sphi 0, %s325
    $region4: #{tpu_custom_call.1} parent=1 // loop_header_branch
      %24 = sbr.rel (%p22) target = $region8
    $region5: #{tpu_custom_call.1} parent=1 // loop_body
      %s26 = ssub.s32 %s21, 1
      %s27 = ssub.s32 %s21, 2
      %s34 = sadd.s32 1, %s29
      %p35 = scmp.ge.s32.totalorder %s34, 1
      %s36 = scalar_select %p35, 0, %s34
      %s37 = sadd.s32 1, %s28
      %s38 = scalar_select %p35, %s37, %s28
      %p39 = scmp.ge.s32.totalorder %s38, 2
      %s40 = scalar_select %p39, 0, %s38
      %s41 = ssub.s32 %s28, %s40
      %s42 = ssub.s32 %s29, %s36
      %s43 = sor.u32 %s41, %s42
      %p44 = scmp.eq.s32.totalorder %s43, 0
      %s46 = sadd.s32 %s45, 1
      %s47 = scalar_select %p44, %s45, %s46
      %p50 = pneg %p44
      %p51 = scmp.eq.s32.totalorder %s21, 1
      %p52 = por %p50, %p51
      %p53 = scmp.ne.s32.totalorder %s45, %s48
      %p54 = scmp.eq.s32.totalorder %s21, 0
      %p55 = por %p53, %p54
      %p56 = scmp.ne.s32.totalorder %s45, %s48
      %p57 = scmp.eq.s32.totalorder %s26, 1
      %p58 = por %p56, %p57
      %p59 = scmp.ne.s32.totalorder %s48, %s49
      %p60 = scmp.eq.s32.totalorder %s26, 0
      %p61 = por %p59, %p60
      %p62 = scmp.ne.s32.totalorder %s48, %s49
      %p63 = scmp.eq.s32.totalorder %s27, 1
      %p64 = por %p62, %p63
      %p66 = scmp.ne.s32.totalorder %s49, %s65
      %p67 = scmp.eq.s32.totalorder %s27, 0
      %p68 = por %p66, %p67
      %s69 = ssub.s32 %s28, %s40
      %p70 = scmp.eq.s32.totalorder %s69, 0
      %s72 = sadd.s32 %s71, 1
      %s73 = scalar_select %p70, %s71, %s72
      %p76 = pneg %p70
      %p77 = scmp.eq.s32.totalorder %s21, 1
      %p78 = por %p76, %p77
      %p79 = scmp.ne.s32.totalorder %s71, %s74
      %p80 = scmp.eq.s32.totalorder %s21, 0
      %p81 = por %p79, %p80
      %p82 = scmp.ne.s32.totalorder %s71, %s74
      %p83 = scmp.eq.s32.totalorder %s26, 1
      %p84 = por %p82, %p83
      %p85 = scmp.ne.s32.totalorder %s74, %s75
      %p86 = scmp.eq.s32.totalorder %s26, 0
      %p87 = por %p85, %p86
      %p88 = scmp.ne.s32.totalorder %s74, %s75
      %p89 = scmp.eq.s32.totalorder %s27, 1
      %p90 = por %p88, %p89
      %p92 = scmp.ne.s32.totalorder %s75, %s91
      %p93 = scmp.eq.s32.totalorder %s27, 0
      %p94 = por %p92, %p93
      %s95 = ssub.s32 %s28, %s40
      %p96 = scmp.eq.s32.totalorder %s95, 0
      %s98 = sadd.s32 %s97, 1
      %s99 = scalar_select %p96, %s97, %s98
      %p102 = pneg %p96
      %p103 = scmp.eq.s32.totalorder %s21, 1
      %p104 = por %p102, %p103
      %p105 = scmp.ne.s32.totalorder %s97, %s100
      %p106 = scmp.eq.s32.totalorder %s21, 0
      %p107 = por %p105, %p106
      %p108 = scmp.ne.s32.totalorder %s97, %s100
      %p109 = scmp.eq.s32.totalorder %s26, 1
      %p110 = por %p108, %p109
      %p111 = scmp.ne.s32.totalorder %s100, %s101
      %p112 = scmp.eq.s32.totalorder %s26, 0
      %p113 = por %p111, %p112
      %p114 = scmp.ne.s32.totalorder %s100, %s101
      %p115 = scmp.eq.s32.totalorder %s27, 1
      %p116 = por %p114, %p115
      %p118 = scmp.ne.s32.totalorder %s101, %s117
      %p119 = scmp.eq.s32.totalorder %s27, 0
      %p120 = por %p118, %p119
      %s121 = ssub.s32 %s28, %s40
      %s122 = ssub.s32 %s29, %s36
      %s123 = sor.u32 %s121, %s122
      %p124 = scmp.eq.s32.totalorder %s123, 0
      %s126 = sadd.s32 %s125, 1
      %s127 = scalar_select %p124, %s125, %s126
      %p130 = pneg %p124
      %p131 = scmp.eq.s32.totalorder %s21, 1
      %p132 = por %p130, %p131
      %p133 = scmp.ne.s32.totalorder %s125, %s128
      %p134 = scmp.eq.s32.totalorder %s21, 0
      %p135 = por %p133, %p134
      %p136 = scmp.ne.s32.totalorder %s125, %s128
      %p137 = scmp.eq.s32.totalorder %s26, 1
      %p138 = por %p136, %p137
      %p139 = scmp.ne.s32.totalorder %s128, %s129
      %p140 = scmp.eq.s32.totalorder %s26, 0
      %p141 = por %p139, %p140
      %p142 = scmp.ne.s32.totalorder %s128, %s129
      %p143 = scmp.eq.s32.totalorder %s27, 1
      %p144 = por %p142, %p143
      %p146 = scmp.ne.s32.totalorder %s129, %s145
      %p147 = scmp.eq.s32.totalorder %s27, 0
      %p148 = por %p146, %p147
      %s150 = sadd.s32 %s149, 1
      %p153 = scmp.eq.s32.totalorder %s21, 1
      %p154 = scmp.ne.s32.totalorder %s149, %s151
      %p155 = scmp.eq.s32.totalorder %s21, 0
      %p156 = por %p154, %p155
      %p157 = scmp.ne.s32.totalorder %s149, %s151
      %p158 = scmp.eq.s32.totalorder %s26, 1
      %p159 = por %p157, %p158
      %p160 = scmp.ne.s32.totalorder %s151, %s152
      %p161 = scmp.eq.s32.totalorder %s26, 0
      %p162 = por %p160, %p161
      %p163 = scmp.ne.s32.totalorder %s151, %s152
      %p164 = scmp.eq.s32.totalorder %s27, 1
      %p165 = por %p163, %p164
      %p167 = scmp.ne.s32.totalorder %s152, %s166
      %p168 = scmp.eq.s32.totalorder %s27, 0
      %p169 = por %p167, %p168
      %s171 = sadd.s32 %s170, 1
      %p174 = scmp.eq.s32.totalorder %s21, 1
      %p175 = scmp.ne.s32.totalorder %s170, %s172
      %p176 = scmp.eq.s32.totalorder %s21, 0
      %p177 = por %p175, %p176
      %p178 = scmp.ne.s32.totalorder %s170, %s172
      %p179 = scmp.eq.s32.totalorder %s26, 1
      %p180 = por %p178, %p179
      %p181 = scmp.ne.s32.totalorder %s172, %s173
      %p182 = scmp.eq.s32.totalorder %s26, 0
      %p183 = por %p181, %p182
      %p184 = scmp.ne.s32.totalorder %s172, %s173
      %p185 = scmp.eq.s32.totalorder %s27, 1
      %p186 = por %p184, %p185
      %p188 = scmp.ne.s32.totalorder %s173, %s187
      %p189 = scmp.eq.s32.totalorder %s27, 0
      %p190 = por %p188, %p189
      %s192 = sadd.s32 %s191, 1
      %p195 = scmp.eq.s32.totalorder %s21, 1
      %p196 = scmp.ne.s32.totalorder %s191, %s193
      %p197 = scmp.eq.s32.totalorder %s21, 0
      %p198 = por %p196, %p197
      %p199 = scmp.ne.s32.totalorder %s191, %s193
      %p200 = scmp.eq.s32.totalorder %s26, 1
      %p201 = por %p199, %p200
      %p202 = scmp.ne.s32.totalorder %s193, %s194
      %p203 = scmp.eq.s32.totalorder %s26, 0
      %p204 = por %p202, %p203
      %p205 = scmp.ne.s32.totalorder %s193, %s194
      %p206 = scmp.eq.s32.totalorder %s27, 1
      %p207 = por %p205, %p206
      %p209 = scmp.ne.s32.totalorder %s194, %s208
      %p210 = scmp.eq.s32.totalorder %s27, 0
      %p211 = por %p209, %p210
      %s213 = sadd.s32 %s212, 1
      %p216 = scmp.eq.s32.totalorder %s21, 1
      %p217 = scmp.ne.s32.totalorder %s212, %s214
      %p218 = scmp.eq.s32.totalorder %s21, 0
      %p219 = por %p217, %p218
      %p220 = scmp.ne.s32.totalorder %s212, %s214
      %p221 = scmp.eq.s32.totalorder %s26, 1
      %p222 = por %p220, %p221
      %p223 = scmp.ne.s32.totalorder %s214, %s215
      %p224 = scmp.eq.s32.totalorder %s26, 0
      %p225 = por %p223, %p224
      %p226 = scmp.ne.s32.totalorder %s214, %s215
      %p227 = scmp.eq.s32.totalorder %s27, 1
      %p228 = por %p226, %p227
      %p230 = scmp.ne.s32.totalorder %s215, %s229
      %p231 = scmp.eq.s32.totalorder %s27, 0
      %p232 = por %p230, %p231
      %s234 = sadd.s32 %s233, 1
      %p237 = scmp.eq.s32.totalorder %s21, 1
      %p238 = scmp.ne.s32.totalorder %s233, %s235
      %p239 = scmp.eq.s32.totalorder %s21, 0
      %p240 = por %p238, %p239
      %p241 = scmp.ne.s32.totalorder %s233, %s235
      %p242 = scmp.eq.s32.totalorder %s26, 1
      %p243 = por %p241, %p242
      %p244 = scmp.ne.s32.totalorder %s235, %s236
      %p245 = scmp.eq.s32.totalorder %s26, 0
      %p246 = por %p244, %p245
      %p247 = scmp.ne.s32.totalorder %s235, %s236
      %p248 = scmp.eq.s32.totalorder %s27, 1
      %p249 = por %p247, %p248
      %p251 = scmp.ne.s32.totalorder %s236, %s250
      %p252 = scmp.eq.s32.totalorder %s27, 0
      %p253 = por %p251, %p252
      %s255 = sadd.s32 %s254, 1
      %p258 = scmp.eq.s32.totalorder %s21, 1
      %p259 = scmp.ne.s32.totalorder %s254, %s256
      %p260 = scmp.eq.s32.totalorder %s21, 0
      %p261 = por %p259, %p260
      %p262 = scmp.ne.s32.totalorder %s254, %s256
      %p263 = scmp.eq.s32.totalorder %s26, 1
      %p264 = por %p262, %p263
      %p265 = scmp.ne.s32.totalorder %s256, %s257
      %p266 = scmp.eq.s32.totalorder %s26, 0
      %p267 = por %p265, %p266
      %p268 = scmp.ne.s32.totalorder %s256, %s257
      %p269 = scmp.eq.s32.totalorder %s27, 1
      %p270 = por %p268, %p269
      %p272 = scmp.ne.s32.totalorder %s257, %s271
      %p273 = scmp.eq.s32.totalorder %s27, 0
      %p274 = por %p272, %p273
      %s276 = sadd.s32 %s275, 1
      %p279 = scmp.eq.s32.totalorder %s21, 1
      %p280 = scmp.ne.s32.totalorder %s275, %s277
      %p281 = scmp.eq.s32.totalorder %s21, 0
      %p282 = por %p280, %p281
      %p283 = scmp.ne.s32.totalorder %s275, %s277
      %p284 = scmp.eq.s32.totalorder %s26, 1
      %p285 = por %p283, %p284
      %p286 = scmp.ne.s32.totalorder %s277, %s278
      %p287 = scmp.eq.s32.totalorder %s26, 0
      %p288 = por %p286, %p287
      %p289 = scmp.ne.s32.totalorder %s277, %s278
      %p290 = scmp.eq.s32.totalorder %s27, 1
      %p291 = por %p289, %p290
      %p293 = scmp.ne.s32.totalorder %s278, %s292
      %p294 = scmp.eq.s32.totalorder %s27, 0
      %p295 = por %p293, %p294
      %s297 = sadd.s32 %s296, 1
      %p300 = scmp.eq.s32.totalorder %s21, 1
      %p301 = scmp.ne.s32.totalorder %s296, %s298
      %p302 = scmp.eq.s32.totalorder %s21, 0
      %p303 = por %p301, %p302
      %p304 = scmp.ne.s32.totalorder %s296, %s298
      %p305 = scmp.eq.s32.totalorder %s26, 1
      %p306 = por %p304, %p305
      %p307 = scmp.ne.s32.totalorder %s298, %s299
      %p308 = scmp.eq.s32.totalorder %s26, 0
      %p309 = por %p307, %p308
      %p310 = scmp.ne.s32.totalorder %s298, %s299
      %p311 = scmp.eq.s32.totalorder %s27, 1
      %p312 = por %p310, %p311
      %p314 = scmp.ne.s32.totalorder %s299, %s313
      %p315 = scmp.eq.s32.totalorder %s27, 0
      %p316 = por %p314, %p315
      %s317 = ssub.s32 %s28, %s40
      %s318 = ssub.s32 %s29, %s36
      %s319 = sor.u32 %s317, %s318
      %p320 = scmp.eq.s32.totalorder %s319, 0
      %s322 = sadd.s32 %s321, 1
      %s323 = scalar_select %p320, %s321, %s322
      %p326 = pneg %p320
      %p327 = scmp.eq.s32.totalorder %s21, 1
      %p328 = por %p326, %p327
      %p329 = scmp.ne.s32.totalorder %s321, %s324
      %p330 = scmp.eq.s32.totalorder %s21, 0
      %p331 = por %p329, %p330
      %p332 = scmp.ne.s32.totalorder %s321, %s324
      %p333 = scmp.eq.s32.totalorder %s26, 1
      %p334 = por %p332, %p333
      %p335 = scmp.ne.s32.totalorder %s324, %s325
      %p336 = scmp.eq.s32.totalorder %s26, 0
      %p337 = por %p335, %p336
      %p338 = scmp.ne.s32.totalorder %s324, %s325
      %p339 = scmp.eq.s32.totalorder %s27, 1
      %p340 = por %p338, %p339
      %p342 = scmp.ne.s32.totalorder %s325, %s341
      %p343 = scmp.eq.s32.totalorder %s27, 0
      %p344 = por %p342, %p343
      %p345 = scmp.le.s32.totalorder 1, %s21
      %p346 = scmp.lt.s32.totalorder %s21, 3
      %p347 = pnand %p345, %p346
      %p348 = pneg %p347
      // Predicated region
      $region9: #{tpu_custom_call.1} parent=5 // pred_check
        _
      $region10: #{tpu_custom_call.1} parent=5 // pred_check_branch
        %350 = sbr.rel (%p347) target = $region12
      $region11: #{tpu_custom_call.1} parent=5 // pred_region
        %s351 = ssub.s32 %s21, 1
        // Predicated region
        $region13: #{tpu_custom_call.1} parent=11 // pred_check
          %p352 = pneg %p162
        $region14: #{tpu_custom_call.1} parent=11 // pred_check_branch
          %354 = sbr.rel (%p352) target = $region16
        $region15: #{tpu_custom_call.1} parent=11 // pred_region
          _
        $region16: #{tpu_custom_call.1} parent=11 // pred_fallthru
          _
        // Predicated region
        $region17: #{tpu_custom_call.1} parent=11 // pred_check
          %p355 = pneg %p183
        $region18: #{tpu_custom_call.1} parent=11 // pred_check_branch
          %357 = sbr.rel (%p355) target = $region20
        $region19: #{tpu_custom_call.1} parent=11 // pred_region
          _
        $region20: #{tpu_custom_call.1} parent=11 // pred_fallthru
          _
        // Predicated region
        $region21: #{tpu_custom_call.1} parent=11 // pred_check
          %p358 = pneg %p204
        $region22: #{tpu_custom_call.1} parent=11 // pred_check_branch
          %360 = sbr.rel (%p358) target = $region24
        $region23: #{tpu_custom_call.1} parent=11 // pred_region
          _
        $region24: #{tpu_custom_call.1} parent=11 // pred_fallthru
          _
        // Predicated region
        $region25: #{tpu_custom_call.1} parent=11 // pred_check
          %p361 = pneg %p225
        $region26: #{tpu_custom_call.1} parent=11 // pred_check_branch
          %363 = sbr.rel (%p361) target = $region28
        $region27: #{tpu_custom_call.1} parent=11 // pred_region
          _
        $region28: #{tpu_custom_call.1} parent=11 // pred_fallthru
          _
        // Predicated region
        $region29: #{tpu_custom_call.1} parent=11 // pred_check
          %p364 = pneg %p246
        $region30: #{tpu_custom_call.1} parent=11 // pred_check_branch
          %366 = sbr.rel (%p364) target = $region32
        $region31: #{tpu_custom_call.1} parent=11 // pred_region
          _
        $region32: #{tpu_custom_call.1} parent=11 // pred_fallthru
          _
        // Predicated region
        $region33: #{tpu_custom_call.1} parent=11 // pred_check
          %p367 = pneg %p267
        $region34: #{tpu_custom_call.1} parent=11 // pred_check_branch
          %369 = sbr.rel (%p367) target = $region36
        $region35: #{tpu_custom_call.1} parent=11 // pred_region
          _
        $region36: #{tpu_custom_call.1} parent=11 // pred_fallthru
          _
        // Predicated region
        $region37: #{tpu_custom_call.1} parent=11 // pred_check
          %p370 = pneg %p288
        $region38: #{tpu_custom_call.1} parent=11 // pred_check_branch
          %372 = sbr.rel (%p370) target = $region40
        $region39: #{tpu_custom_call.1} parent=11 // pred_region
          _
        $region40: #{tpu_custom_call.1} parent=11 // pred_fallthru
          _
        // Predicated region
        $region41: #{tpu_custom_call.1} parent=11 // pred_check
          %p373 = pneg %p309
        $region42: #{tpu_custom_call.1} parent=11 // pred_check_branch
          %375 = sbr.rel (%p373) target = $region44
        $region43: #{tpu_custom_call.1} parent=11 // pred_region
          _
        $region44: #{tpu_custom_call.1} parent=11 // pred_fallthru
          _
      $region12: #{tpu_custom_call.1} parent=5 // pred_fallthru
        _
      %p376 = scmp.lt.s32.totalorder %s21, 2
      // Predicated region
      $region45: #{tpu_custom_call.1} parent=5 // pred_check
        %p377 = pneg %p376
      $region46: #{tpu_custom_call.1} parent=5 // pred_check_branch
        %379 = sbr.rel (%p377) target = $region48
      $region47: #{tpu_custom_call.1} parent=5 // pred_region
        // Predicated region
        $region49: #{tpu_custom_call.1} parent=47 // pred_check
          %p380 = pneg %p55
        $region50: #{tpu_custom_call.1} parent=47 // pred_check_branch
          %382 = sbr.rel (%p380) target = $region52
        $region51: #{tpu_custom_call.1} parent=47 // pred_region
          %p383 = scmp.lt.s32.totalorder %s28, 1
          %s384 = scalar_select %p383, %s28, 1
          %p385 = scmp.lt.s32.totalorder %s29, 0
          %s386 = scalar_select %p385, %s29, 0
          %s387 = sadd.s32 %s386, %s384
          %s388 = smul.addr %s387, 8
          %s389 = scalar_lea.vmem %s0, %s388
        $region52: #{tpu_custom_call.1} parent=47 // pred_fallthru
          _
        // Predicated region
        $region53: #{tpu_custom_call.1} parent=47 // pred_check
          %p390 = pneg %p81
        $region54: #{tpu_custom_call.1} parent=47 // pred_check_branch
          %392 = sbr.rel (%p390) target = $region56
        $region55: #{tpu_custom_call.1} parent=47 // pred_region
          %p393 = scmp.lt.s32.totalorder %s28, 1
          %s394 = scalar_select %p393, %s28, 1
          %s395 = smul.addr %s394, 8
          %s396 = scalar_lea.vmem %s1, %s395
        $region56: #{tpu_custom_call.1} parent=47 // pred_fallthru
          _
        // Predicated region
        $region57: #{tpu_custom_call.1} parent=47 // pred_check
          %p397 = pneg %p107
        $region58: #{tpu_custom_call.1} parent=47 // pred_check_branch
          %399 = sbr.rel (%p397) target = $region60
        $region59: #{tpu_custom_call.1} parent=47 // pred_region
          %p400 = scmp.lt.s32.totalorder %s28, 1
          %s401 = scalar_select %p400, %s28, 1
          %s402 = smul.addr %s401, 8
          %s403 = scalar_lea.vmem %s2, %s402
        $region60: #{tpu_custom_call.1} parent=47 // pred_fallthru
          _
        // Predicated region
        $region61: #{tpu_custom_call.1} parent=47 // pred_check
          %p404 = pneg %p135
        $region62: #{tpu_custom_call.1} parent=47 // pred_check_branch
          %406 = sbr.rel (%p404) target = $region64
        $region63: #{tpu_custom_call.1} parent=47 // pred_region
          %p407 = scmp.lt.s32.totalorder %s28, 1
          %s408 = scalar_select %p407, %s28, 1
          %p409 = scmp.lt.s32.totalorder %s29, 0
          %s410 = scalar_select %p409, %s29, 0
          %s411 = sadd.s32 %s410, %s408
          %s412 = smul.addr %s411, 8
          %s413 = scalar_lea.vmem %s3, %s412
        $region64: #{tpu_custom_call.1} parent=47 // pred_fallthru
          _
      $region48: #{tpu_custom_call.1} parent=5 // pred_fallthru
        _
      %p414 = scmp.le.s32.totalorder 1, %s21
      %p415 = scmp.lt.s32.totalorder %s21, 3
      %p416 = pnand %p414, %p415
      %p417 = pneg %p416
      // Predicated region
      $region65: #{tpu_custom_call.1} parent=5 // pred_check
        _
      $region66: #{tpu_custom_call.1} parent=5 // pred_check_branch
        %419 = sbr.rel (%p416) target = $region68
      $region67: #{tpu_custom_call.1} parent=5 // pred_region
        %s420 = ssub.s32 %s21, 1
        %p421 = scmp.lt.s32.totalorder %s30, 1
        %s422 = scalar_select %p421, %s30, 1
        %p423 = scmp.lt.s32.totalorder %s31, 0
        %s424 = scalar_select %p423, %s31, 0
        %s425 = sadd.s32 %s424, %s422
        %s426 = smul.addr %s425, 8
        %s427 = scalar_lea.vmem %s0, %s426
        %p428 = pneg %p61
        %p429 = pneg %p58
        %p430 = scmp.lt.s32.totalorder %s30, 1
        %s431 = scalar_select %p430, %s30, 1
        %s432 = smul.addr %s431, 8
        %s433 = scalar_lea.vmem %s1, %s432
        %p434 = pneg %p87
        %p435 = pneg %p84
        %p436 = scmp.lt.s32.totalorder %s30, 1
        %s437 = scalar_select %p436, %s30, 1
        %s438 = smul.addr %s437, 8
        %s439 = scalar_lea.vmem %s2, %s438
        %p440 = pneg %p113
        %p441 = pneg %p110
        %p442 = scmp.lt.s32.totalorder %s30, 1
        %s443 = scalar_select %p442, %s30, 1
        %p444 = scmp.lt.s32.totalorder %s31, 0
        %s445 = scalar_select %p444, %s31, 0
        %s446 = sadd.s32 %s445, %s443
        %s447 = smul.addr %s446, 8
        %s448 = scalar_lea.vmem %s3, %s447
        %p449 = pneg %p141
        %p450 = pneg %p138
        %p451 = pneg %p162
        %p452 = pneg %p159
        %p453 = pneg %p183
        %p454 = pneg %p180
        %p455 = pneg %p204
        %p456 = pneg %p201
        %p457 = pneg %p225
        %p458 = pneg %p222
        %p459 = pneg %p246
        %p460 = pneg %p243
        %p461 = pneg %p267
        %p462 = pneg %p264
        %p463 = pneg %p288
        %p464 = pneg %p285
        %p465 = pneg %p309
        %p466 = pneg %p306
        %p467 = pneg %p337
        %p468 = pneg %p334
        %s469 = sand.u32 %s324, 1
        %s470 = scalar_lea.sflag [#allocation3], %s469
        %s471 = sand.u32 %s324, 1
        %s472 = smul.addr %s471, 8
        %s473 = scalar_lea.vmem [#allocation2], %s472
        %p474 = scmp.lt.s32.totalorder %s30, 1
        %s475 = scalar_select %p474, %s30, 1
        %p476 = scmp.lt.s32.totalorder %s31, 0
        %s477 = scalar_select %p476, %s31, 0
        %s478 = sadd.s32 %s477, %s475
        %s479 = smul.addr %s478, 8
        %s480 = scalar_lea.vmem %s0, %s479
        %p481 = scmp.lt.s32.totalorder %s30, 1
        %s482 = scalar_select %p481, %s30, 1
        %s483 = smul.addr %s482, 8
        %s484 = scalar_lea.vmem %s1, %s483
        %p485 = scmp.lt.s32.totalorder %s30, 1
        %s486 = scalar_select %p485, %s30, 1
        %s487 = smul.addr %s486, 8
        %s488 = scalar_lea.vmem %s2, %s487
        %p489 = scmp.lt.s32.totalorder %s30, 1
        %s490 = scalar_select %p489, %s30, 1
        %p491 = scmp.lt.s32.totalorder %s31, 0
        %s492 = scalar_select %p491, %s31, 0
        %s493 = sadd.s32 %s492, %s490
        %s494 = smul.addr %s493, 8
        %s495 = scalar_lea.vmem %s3, %s494
        %v497 = vld [vmem:[%s480] sm:$0xff]
        %v498 = vpack.c.bf16 %v497, %v497
        %v499 = vld [vmem:[%s484] sm:$0xff]
        %v500 = vpack.c.bf16 %v499, %v499
        %v501 = vld [vmem:[%s488] sm:$0xff]
        %v502 = vpack.c.bf16 %v501, %v501
        %v503 = vld [vmem:[%s495] sm:$0xff]
        %vm504 = vcmp.eq.f32.partialorder %v503, 0.0
        %v505 = vld [vmem:[%s4] sm:$0xf]
        %v506 = vld [vmem:[%s4 + $0x4] sm:$0xf]
        %v507 = vld [vmem:[%s4 + $0x8] sm:$0xf]
        %v508 = vld [vmem:[%s4 + $0xc] sm:$0xf]
        %v509 = vld [vmem:[%s5] sm:$0x1]
        %v511 = vperm.slane %v509, 0
        %v517 = vunpack.c.l.b16 %v505
        %v518 = vunpack.c.l.b16 %v506
        %v519 = vunpack.c.l.b16 %v507
        %v520 = vunpack.c.l.b16 %v508
        %v521 = vpack.c.b16 %v518, %v517
        %v522 = vpack.c.b16 %v520, %v519
        %vm525 = vcmask 261120
        %v527 = vsel %vm525, %v498, 0
        %529 = vmatpush.bf16.msra.mxu0 0
        %530 = vmatpush.bf16.msra.mxu0 0
        %531 = vmatpush.bf16.msra.mxu0 0
        %532 = vmatpush.bf16.msra.mxu0 0
        %533 = vmatpush.bf16.msra.mxu0 0
        %534 = vmatpush.bf16.msra.mxu0 0
        %535 = vmatpush.bf16.msra.mxu0 %v522
        %536 = vmatpush.bf16.msra.mxu0 %v521
        %537 = vmatmul.bf16.gmra.mxu0 %v527
        %v538 = vpop.f32.mrf.mxu0
        %v539 = vadd.f32 %v511, %v538
        %v540 = vpop.f32.mrf.mxu0
        %541 = vdwg.mxu0
        %v542 = vld [vmem:[%s6] sm:$0xf]
        %v543 = vld [vmem:[%s6 + $0x4] sm:$0xf]
        %v544 = vld [vmem:[%s6 + $0x8] sm:$0xf]
        %v545 = vld [vmem:[%s6 + $0xc] sm:$0xf]
        %v546 = vld [vmem:[%s7] sm:$0x1]
        %v548 = vperm.slane %v546, 0
        %v554 = vunpack.c.l.b16 %v542
        %v555 = vunpack.c.l.b16 %v543
        %v556 = vunpack.c.l.b16 %v544
        %v557 = vunpack.c.l.b16 %v545
        %v558 = vpack.c.b16 %v555, %v554
        %v559 = vpack.c.b16 %v557, %v556
        %v563 = vsel %vm525, %v500, 0
        %565 = vmatpush.bf16.msra.mxu0 0
        %566 = vmatpush.bf16.msra.mxu0 0
        %567 = vmatpush.bf16.msra.mxu0 0
        %568 = vmatpush.bf16.msra.mxu0 0
        %569 = vmatpush.bf16.msra.mxu0 0
        %570 = vmatpush.bf16.msra.mxu0 0
        %571 = vmatpush.bf16.msra.mxu0 %v559
        %572 = vmatpush.bf16.msra.mxu0 %v558
        %573 = vmatmul.bf16.gmra.mxu0 %v563
        %v574 = vpop.f32.mrf.mxu0
        %v575 = vadd.f32 %v548, %v574
        %v576 = vpop.f32.mrf.mxu0
        %577 = vdwg.mxu0
        %v578 = vld [vmem:[%s8] sm:$0xf]
        %v579 = vld [vmem:[%s8 + $0x4] sm:$0xf]
        %v580 = vld [vmem:[%s8 + $0x8] sm:$0xf]
        %v581 = vld [vmem:[%s8 + $0xc] sm:$0xf]
        %v582 = vld [vmem:[%s9] sm:$0x1]
        %v584 = vperm.slane %v582, 0
        %v590 = vunpack.c.l.b16 %v578
        %v591 = vunpack.c.l.b16 %v579
        %v592 = vunpack.c.l.b16 %v580
        %v593 = vunpack.c.l.b16 %v581
        %v594 = vpack.c.b16 %v591, %v590
        %v595 = vpack.c.b16 %v593, %v592
        %v599 = vsel %vm525, %v502, 0
        %601 = vmatpush.bf16.msra.mxu0 0
        %602 = vmatpush.bf16.msra.mxu0 0
        %603 = vmatpush.bf16.msra.mxu0 0
        %604 = vmatpush.bf16.msra.mxu0 0
        %605 = vmatpush.bf16.msra.mxu0 0
        %606 = vmatpush.bf16.msra.mxu0 0
        %607 = vmatpush.bf16.msra.mxu0 %v595
        %608 = vmatpush.bf16.msra.mxu0 %v594
        %609 = vmatmul.bf16.gmra.mxu0 %v599
        %v610 = vpop.f32.mrf.mxu0
        %v611 = vadd.f32 %v584, %v610
        %v612 = vpop.f32.mrf.mxu0
        %613 = vdwg.mxu0
        %v614 = vpack.c.bf16 %v539, %v539
        %v615 = vpack.c.bf16 %v575, %v575
        %vm616 = vcmask 64512
        %v618 = vsel %vm616, %v614, 0
        %v621 = vsel %vm616, %v615, 0
        %623 = vmatpush.bf16.xpose.msra.mxu0 0
        %624 = vmatpush.bf16.xpose.msra.mxu0 0
        %625 = vmatpush.bf16.xpose.msra.mxu0 0
        %626 = vmatpush.bf16.xpose.msra.mxu0 0
        %627 = vmatpush.bf16.xpose.msra.mxu0 0
        %628 = vmatpush.bf16.xpose.msra.mxu0 0
        %629 = vmatpush.bf16.xpose.msra.mxu0 0
        %630 = vmatpush.bf16.xpose.msra.mxu0 %v621
        %631 = vmatmul.bf16.gmra.mxu0 %v618
        %v632 = vpop.f32.mrf.mxu0
        %v633 = vadd.f32 0.0, %v632
        %v634 = vpop.f32.mrf.mxu0
        %635 = vdwg.mxu0
        %v636 = vsel %vm504, -3.4028235e+38, %v633
        %v637 = vsel %vm616, %v636, -inf
        %638 = vmax.xlane.f32.xlu0 %v637
        %v639 = vpop.xlane.xlu0 %638
        %v640 = vsub.f32 %v636, %v639
        %v641 = vmul.f32 %v640, 1.442695
        %v642 = vpow.pop %v641
        %v643 = vsel %vm616, %v642, 0.0
        %644 = vadd.xlane.f32.xlu0 %v643
        %v645 = vpop.xlane.xlu0 %644
        %v646 = vrcp.pop %v645
        %v647 = vmul.f32 %v642, %v646
        %v648 = vsel %vm504, 0.0, %v647
        %v649 = vpack.c.bf16 %v648, %v648
        %v650 = vpack.c.bf16 %v611, %v611
        %v652 = vsel %vm616, %v649, 0
        %vm654 = vcmask 1043456
        %v656 = vsel %vm654, %v650, 0
        %658 = vmatpush.bf16.msra.mxu0 0
        %659 = vmatpush.bf16.msra.mxu0 0
        %660 = vmatpush.bf16.msra.mxu0 0
        %661 = vmatpush.bf16.msra.mxu0 0
        %662 = vmatpush.bf16.msra.mxu0 0
        %663 = vmatpush.bf16.msra.mxu0 0
        %664 = vmatpush.bf16.msra.mxu0 0
        %665 = vmatpush.bf16.msra.mxu0 %v656
        %666 = vmatmul.bf16.gmra.mxu0 %v652
        %v667 = vpop.f32.mrf.mxu0
        %v668 = vadd.f32 0.0, %v667
        %v669 = vpop.f32.mrf.mxu0
        %670 = vdwg.mxu0
        %v671 = vpack.c.bf16 %v668, %v668
        %v672 = vld [vmem:[%s10] sm:$0xf]
        %s673 = scalar_lea.vmem %s4, 16
        %v674 = vld [vmem:[%s673] sm:$0xf]
        %v675 = vld [vmem:[%s673 + $0x4] sm:$0xf]
        %v676 = vld [vmem:[%s673 + $0x8] sm:$0xf]
        %v677 = vld [vmem:[%s673 + $0xc] sm:$0xf]
        %s678 = scalar_lea.vmem %s5, 1
        %v679 = vld [vmem:[%s678] sm:$0x1]
        %v681 = vperm.slane %v679, 0
        %v687 = vunpack.c.l.b16 %v674
        %v688 = vunpack.c.l.b16 %v675
        %v689 = vunpack.c.l.b16 %v676
        %v690 = vunpack.c.l.b16 %v677
        %v691 = vpack.c.b16 %v688, %v687
        %v692 = vpack.c.b16 %v690, %v689
        %695 = vmatpush.bf16.msra.mxu0 0
        %696 = vmatpush.bf16.msra.mxu0 0
        %697 = vmatpush.bf16.msra.mxu0 0
        %698 = vmatpush.bf16.msra.mxu0 0
        %699 = vmatpush.bf16.msra.mxu0 0
        %700 = vmatpush.bf16.msra.mxu0 0
        %701 = vmatpush.bf16.msra.mxu0 %v692
        %702 = vmatpush.bf16.msra.mxu0 %v691
        %703 = vmatmul.bf16.gmra.mxu0 %v527
        %v704 = vpop.f32.mrf.mxu0
        %v705 = vadd.f32 %v681, %v704
        %v706 = vpop.f32.mrf.mxu0
        %707 = vdwg.mxu0
        %s708 = scalar_lea.vmem %s6, 16
        %v709 = vld [vmem:[%s708] sm:$0xf]
        %v710 = vld [vmem:[%s708 + $0x4] sm:$0xf]
        %v711 = vld [vmem:[%s708 + $0x8] sm:$0xf]
        %v712 = vld [vmem:[%s708 + $0xc] sm:$0xf]
        %s713 = scalar_lea.vmem %s7, 1
        %v714 = vld [vmem:[%s713] sm:$0x1]
        %v716 = vperm.slane %v714, 0
        %v722 = vunpack.c.l.b16 %v709
        %v723 = vunpack.c.l.b16 %v710
        %v724 = vunpack.c.l.b16 %v711
        %v725 = vunpack.c.l.b16 %v712
        %v726 = vpack.c.b16 %v723, %v722
        %v727 = vpack.c.b16 %v725, %v724
        %730 = vmatpush.bf16.msra.mxu0 0
        %731 = vmatpush.bf16.msra.mxu0 0
        %732 = vmatpush.bf16.msra.mxu0 0
        %733 = vmatpush.bf16.msra.mxu0 0
        %734 = vmatpush.bf16.msra.mxu0 0
        %735 = vmatpush.bf16.msra.mxu0 0
        %736 = vmatpush.bf16.msra.mxu0 %v727
        %737 = vmatpush.bf16.msra.mxu0 %v726
        %738 = vmatmul.bf16.gmra.mxu0 %v563
        %v739 = vpop.f32.mrf.mxu0
        %v740 = vadd.f32 %v716, %v739
        %v741 = vpop.f32.mrf.mxu0
        %742 = vdwg.mxu0
        %s743 = scalar_lea.vmem %s8, 16
        %v744 = vld [vmem:[%s743] sm:$0xf]
        %v745 = vld [vmem:[%s743 + $0x4] sm:$0xf]
        %v746 = vld [vmem:[%s743 + $0x8] sm:$0xf]
        %v747 = vld [vmem:[%s743 + $0xc] sm:$0xf]
        %s748 = scalar_lea.vmem %s9, 1
        %v749 = vld [vmem:[%s748] sm:$0x1]
        %v751 = vperm.slane %v749, 0
        %v757 = vunpack.c.l.b16 %v744
        %v758 = vunpack.c.l.b16 %v745
        %v759 = vunpack.c.l.b16 %v746
        %v760 = vunpack.c.l.b16 %v747
        %v761 = vpack.c.b16 %v758, %v757
        %v762 = vpack.c.b16 %v760, %v759
        %765 = vmatpush.bf16.msra.mxu0 0
        %766 = vmatpush.bf16.msra.mxu0 0
        %767 = vmatpush.bf16.msra.mxu0 0
        %768 = vmatpush.bf16.msra.mxu0 0
        %769 = vmatpush.bf16.msra.mxu0 0
        %770 = vmatpush.bf16.msra.mxu0 0
        %771 = vmatpush.bf16.msra.mxu0 %v762
        %772 = vmatpush.bf16.msra.mxu0 %v761
        %773 = vmatmul.bf16.gmra.mxu0 %v599
        %v774 = vpop.f32.mrf.mxu0
        %v775 = vadd.f32 %v751, %v774
        %v776 = vpop.f32.mrf.mxu0
        %777 = vdwg.mxu0
        %v778 = vpack.c.bf16 %v705, %v705
        %v779 = vpack.c.bf16 %v740, %v740
        %v781 = vsel %vm616, %v778, 0
        %v784 = vsel %vm616, %v779, 0
        %786 = vmatpush.bf16.xpose.msra.mxu0 0
        %787 = vmatpush.bf16.xpose.msra.mxu0 0
        %788 = vmatpush.bf16.xpose.msra.mxu0 0
        %789 = vmatpush.bf16.xpose.msra.mxu0 0
        %790 = vmatpush.bf16.xpose.msra.mxu0 0
        %791 = vmatpush.bf16.xpose.msra.mxu0 0
        %792 = vmatpush.bf16.xpose.msra.mxu0 0
        %793 = vmatpush.bf16.xpose.msra.mxu0 %v784
        %794 = vmatmul.bf16.gmra.mxu0 %v781
        %v795 = vpop.f32.mrf.mxu0
        %v796 = vadd.f32 0.0, %v795
        %v797 = vpop.f32.mrf.mxu0
        %798 = vdwg.mxu0
        %v799 = vsel %vm504, -3.4028235e+38, %v796
        %v800 = vsel %vm616, %v799, -inf
        %801 = vmax.xlane.f32.xlu0 %v800
        %v802 = vpop.xlane.xlu0 %801
        %v803 = vsub.f32 %v799, %v802
        %v804 = vmul.f32 %v803, 1.442695
        %v805 = vpow.pop %v804
        %v806 = vsel %vm616, %v805, 0.0
        %807 = vadd.xlane.f32.xlu0 %v806
        %v808 = vpop.xlane.xlu0 %807
        %v809 = vrcp.pop %v808
        %v810 = vmul.f32 %v805, %v809
        %v811 = vsel %vm504, 0.0, %v810
        %v812 = vpack.c.bf16 %v811, %v811
        %v813 = vpack.c.bf16 %v775, %v775
        %v815 = vsel %vm616, %v812, 0
        %v818 = vsel %vm654, %v813, 0
        %820 = vmatpush.bf16.msra.mxu0 0
        %821 = vmatpush.bf16.msra.mxu0 0
        %822 = vmatpush.bf16.msra.mxu0 0
        %823 = vmatpush.bf16.msra.mxu0 0
        %824 = vmatpush.bf16.msra.mxu0 0
        %825 = vmatpush.bf16.msra.mxu0 0
        %826 = vmatpush.bf16.msra.mxu0 0
        %827 = vmatpush.bf16.msra.mxu0 %v818
        %828 = vmatmul.bf16.gmra.mxu0 %v815
        %v829 = vpop.f32.mrf.mxu0
        %v830 = vadd.f32 0.0, %v829
        %v831 = vpop.f32.mrf.mxu0
        %832 = vdwg.mxu0
        %v833 = vpack.c.bf16 %v830, %v830
        %s834 = scalar_lea.vmem %s10, 4
        %v835 = vld [vmem:[%s834] sm:$0xf]
        %v837 = vsel %vm616, %v833, 0
        %v840 = vsel %vm654, %v835, 0
        %842 = vmatpush.bf16.msra.mxu0 0
        %843 = vmatpush.bf16.msra.mxu0 0
        %844 = vmatpush.bf16.msra.mxu0 0
        %845 = vmatpush.bf16.msra.mxu0 0
        %846 = vmatpush.bf16.msra.mxu0 0
        %847 = vmatpush.bf16.msra.mxu0 0
        %848 = vmatpush.bf16.msra.mxu0 0
        %849 = vmatpush.bf16.msra.mxu0 %v840
        %850 = vmatmul.bf16.gmra.mxu0 %v837
        %v851 = vpop.f32.mrf.mxu0
        %v852 = vadd.f32 0.0, %v851
        %v853 = vpop.f32.mrf.mxu0
        %854 = vdwg.mxu0
        %v856 = vsel %vm616, %v671, 0
        %v859 = vsel %vm654, %v672, 0
        %861 = vmatpush.bf16.msra.mxu0 0
        %862 = vmatpush.bf16.msra.mxu0 0
        %863 = vmatpush.bf16.msra.mxu0 0
        %864 = vmatpush.bf16.msra.mxu0 0
        %865 = vmatpush.bf16.msra.mxu0 0
        %866 = vmatpush.bf16.msra.mxu0 0
        %867 = vmatpush.bf16.msra.mxu0 0
        %868 = vmatpush.bf16.msra.mxu0 %v859
        %869 = vmatmul.bf16.gmra.mxu0 %v856
        %v870 = vpop.f32.mrf.mxu0
        %v871 = vadd.f32 %v852, %v870
        %v872 = vpop.f32.mrf.mxu0
        %873 = vdwg.mxu0
        %s874 = scalar_lea.vmem %s4, 32
        %v875 = vld [vmem:[%s874] sm:$0xf]
        %v876 = vld [vmem:[%s874 + $0x4] sm:$0xf]
        %v877 = vld [vmem:[%s874 + $0x8] sm:$0xf]
        %v878 = vld [vmem:[%s874 + $0xc] sm:$0xf]
        %s879 = scalar_lea.vmem %s5, 2
        %v880 = vld [vmem:[%s879] sm:$0x1]
        %v882 = vperm.slane %v880, 0
        %v888 = vunpack.c.l.b16 %v875
        %v889 = vunpack.c.l.b16 %v876
        %v890 = vunpack.c.l.b16 %v877
        %v891 = vunpack.c.l.b16 %v878
        %v892 = vpack.c.b16 %v889, %v888
        %v893 = vpack.c.b16 %v891, %v890
        %896 = vmatpush.bf16.msra.mxu0 0
        %897 = vmatpush.bf16.msra.mxu0 0
        %898 = vmatpush.bf16.msra.mxu0 0
        %899 = vmatpush.bf16.msra.mxu0 0
        %900 = vmatpush.bf16.msra.mxu0 0
        %901 = vmatpush.bf16.msra.mxu0 0
        %902 = vmatpush.bf16.msra.mxu0 %v893
        %903 = vmatpush.bf16.msra.mxu0 %v892
        %904 = vmatmul.bf16.gmra.mxu0 %v527
        %v905 = vpop.f32.mrf.mxu0
        %v906 = vadd.f32 %v882, %v905
        %v907 = vpop.f32.mrf.mxu0
        %908 = vdwg.mxu0
        %s909 = scalar_lea.vmem %s6, 32
        %v910 = vld [vmem:[%s909] sm:$0xf]
        %v911 = vld [vmem:[%s909 + $0x4] sm:$0xf]
        %v912 = vld [vmem:[%s909 + $0x8] sm:$0xf]
        %v913 = vld [vmem:[%s909 + $0xc] sm:$0xf]
        %s914 = scalar_lea.vmem %s7, 2
        %v915 = vld [vmem:[%s914] sm:$0x1]
        %v917 = vperm.slane %v915, 0
        %v923 = vunpack.c.l.b16 %v910
        %v924 = vunpack.c.l.b16 %v911
        %v925 = vunpack.c.l.b16 %v912
        %v926 = vunpack.c.l.b16 %v913
        %v927 = vpack.c.b16 %v924, %v923
        %v928 = vpack.c.b16 %v926, %v925
        %931 = vmatpush.bf16.msra.mxu0 0
        %932 = vmatpush.bf16.msra.mxu0 0
        %933 = vmatpush.bf16.msra.mxu0 0
        %934 = vmatpush.bf16.msra.mxu0 0
        %935 = vmatpush.bf16.msra.mxu0 0
        %936 = vmatpush.bf16.msra.mxu0 0
        %937 = vmatpush.bf16.msra.mxu0 %v928
        %938 = vmatpush.bf16.msra.mxu0 %v927
        %939 = vmatmul.bf16.gmra.mxu0 %v563
        %v940 = vpop.f32.mrf.mxu0
        %v941 = vadd.f32 %v917, %v940
        %v942 = vpop.f32.mrf.mxu0
        %943 = vdwg.mxu0
        %s944 = scalar_lea.vmem %s8, 32
        %v945 = vld [vmem:[%s944] sm:$0xf]
        %v946 = vld [vmem:[%s944 + $0x4] sm:$0xf]
        %v947 = vld [vmem:[%s944 + $0x8] sm:$0xf]
        %v948 = vld [vmem:[%s944 + $0xc] sm:$0xf]
        %s949 = scalar_lea.vmem %s9, 2
        %v950 = vld [vmem:[%s949] sm:$0x1]
        %v952 = vperm.slane %v950, 0
        %v958 = vunpack.c.l.b16 %v945
        %v959 = vunpack.c.l.b16 %v946
        %v960 = vunpack.c.l.b16 %v947
        %v961 = vunpack.c.l.b16 %v948
        %v962 = vpack.c.b16 %v959, %v958
        %v963 = vpack.c.b16 %v961, %v960
        %966 = vmatpush.bf16.msra.mxu0 0
        %967 = vmatpush.bf16.msra.mxu0 0
        %968 = vmatpush.bf16.msra.mxu0 0
        %969 = vmatpush.bf16.msra.mxu0 0
        %970 = vmatpush.bf16.msra.mxu0 0
        %971 = vmatpush.bf16.msra.mxu0 0
        %972 = vmatpush.bf16.msra.mxu0 %v963
        %973 = vmatpush.bf16.msra.mxu0 %v962
        %974 = vmatmul.bf16.gmra.mxu0 %v599
        %v975 = vpop.f32.mrf.mxu0
        %v976 = vadd.f32 %v952, %v975
        %v977 = vpop.f32.mrf.mxu0
        %978 = vdwg.mxu0
        %v979 = vpack.c.bf16 %v906, %v906
        %v980 = vpack.c.bf16 %v941, %v941
        %v982 = vsel %vm616, %v979, 0
        %v985 = vsel %vm616, %v980, 0
        %987 = vmatpush.bf16.xpose.msra.mxu0 0
        %988 = vmatpush.bf16.xpose.msra.mxu0 0
        %989 = vmatpush.bf16.xpose.msra.mxu0 0
        %990 = vmatpush.bf16.xpose.msra.mxu0 0
        %991 = vmatpush.bf16.xpose.msra.mxu0 0
        %992 = vmatpush.bf16.xpose.msra.mxu0 0
        %993 = vmatpush.bf16.xpose.msra.mxu0 0
        %994 = vmatpush.bf16.xpose.msra.mxu0 %v985
        %995 = vmatmul.bf16.gmra.mxu0 %v982
        %v996 = vpop.f32.mrf.mxu0
        %v997 = vadd.f32 0.0, %v996
        %v998 = vpop.f32.mrf.mxu0
        %999 = vdwg.mxu0
        %v1000 = vsel %vm504, -3.4028235e+38, %v997
        %v1001 = vsel %vm616, %v1000, -inf
        %1002 = vmax.xlane.f32.xlu0 %v1001
        %v1003 = vpop.xlane.xlu0 %1002
        %v1004 = vsub.f32 %v1000, %v1003
        %v1005 = vmul.f32 %v1004, 1.442695
        %v1006 = vpow.pop %v1005
        %v1007 = vsel %vm616, %v1006, 0.0
        %1008 = vadd.xlane.f32.xlu0 %v1007
        %v1009 = vpop.xlane.xlu0 %1008
        %v1010 = vrcp.pop %v1009
        %v1011 = vmul.f32 %v1006, %v1010
        %v1012 = vsel %vm504, 0.0, %v1011
        %v1013 = vpack.c.bf16 %v1012, %v1012
        %v1014 = vpack.c.bf16 %v976, %v976
        %v1016 = vsel %vm616, %v1013, 0
        %v1019 = vsel %vm654, %v1014, 0
        %1021 = vmatpush.bf16.msra.mxu0 0
        %1022 = vmatpush.bf16.msra.mxu0 0
        %1023 = vmatpush.bf16.msra.mxu0 0
        %1024 = vmatpush.bf16.msra.mxu0 0
        %1025 = vmatpush.bf16.msra.mxu0 0
        %1026 = vmatpush.bf16.msra.mxu0 0
        %1027 = vmatpush.bf16.msra.mxu0 0
        %1028 = vmatpush.bf16.msra.mxu0 %v1019
        %1029 = vmatmul.bf16.gmra.mxu0 %v1016
        %v1030 = vpop.f32.mrf.mxu0
        %v1031 = vadd.f32 0.0, %v1030
        %v1032 = vpop.f32.mrf.mxu0
        %1033 = vdwg.mxu0
        %v1034 = vpack.c.bf16 %v1031, %v1031
        %s1035 = scalar_lea.vmem %s10, 8
        %v1036 = vld [vmem:[%s1035] sm:$0xf]
        %v1038 = vsel %vm616, %v1034, 0
        %v1041 = vsel %vm654, %v1036, 0
        %1043 = vmatpush.bf16.msra.mxu0 0
        %1044 = vmatpush.bf16.msra.mxu0 0
        %1045 = vmatpush.bf16.msra.mxu0 0
        %1046 = vmatpush.bf16.msra.mxu0 0
        %1047 = vmatpush.bf16.msra.mxu0 0
        %1048 = vmatpush.bf16.msra.mxu0 0
        %1049 = vmatpush.bf16.msra.mxu0 0
        %1050 = vmatpush.bf16.msra.mxu0 %v1041
        %1051 = vmatmul.bf16.gmra.mxu0 %v1038
        %v1052 = vpop.f32.mrf.mxu0
        %v1053 = vadd.f32 0.0, %v1052
        %v1054 = vpop.f32.mrf.mxu0
        %1055 = vdwg.mxu0
        %v1056 = vadd.f32 %v871, %v1053
        %s1057 = scalar_lea.vmem %s4, 48
        %v1058 = vld [vmem:[%s1057] sm:$0xf]
        %v1059 = vld [vmem:[%s1057 + $0x4] sm:$0xf]
        %v1060 = vld [vmem:[%s1057 + $0x8] sm:$0xf]
        %v1061 = vld [vmem:[%s1057 + $0xc] sm:$0xf]
        %s1062 = scalar_lea.vmem %s5, 3
        %v1063 = vld [vmem:[%s1062] sm:$0x1]
        %v1065 = vperm.slane %v1063, 0
        %v1071 = vunpack.c.l.b16 %v1058
        %v1072 = vunpack.c.l.b16 %v1059
        %v1073 = vunpack.c.l.b16 %v1060
        %v1074 = vunpack.c.l.b16 %v1061
        %v1075 = vpack.c.b16 %v1072, %v1071
        %v1076 = vpack.c.b16 %v1074, %v1073
        %1079 = vmatpush.bf16.msra.mxu0 0
        %1080 = vmatpush.bf16.msra.mxu0 0
        %1081 = vmatpush.bf16.msra.mxu0 0
        %1082 = vmatpush.bf16.msra.mxu0 0
        %1083 = vmatpush.bf16.msra.mxu0 0
        %1084 = vmatpush.bf16.msra.mxu0 0
        %1085 = vmatpush.bf16.msra.mxu0 %v1076
        %1086 = vmatpush.bf16.msra.mxu0 %v1075
        %1087 = vmatmul.bf16.gmra.mxu0 %v527
        %v1088 = vpop.f32.mrf.mxu0
        %v1089 = vadd.f32 %v1065, %v1088
        %v1090 = vpop.f32.mrf.mxu0
        %1091 = vdwg.mxu0
        %s1092 = scalar_lea.vmem %s6, 48
        %v1093 = vld [vmem:[%s1092] sm:$0xf]
        %v1094 = vld [vmem:[%s1092 + $0x4] sm:$0xf]
        %v1095 = vld [vmem:[%s1092 + $0x8] sm:$0xf]
        %v1096 = vld [vmem:[%s1092 + $0xc] sm:$0xf]
        %s1097 = scalar_lea.vmem %s7, 3
        %v1098 = vld [vmem:[%s1097] sm:$0x1]
        %v1100 = vperm.slane %v1098, 0
        %v1106 = vunpack.c.l.b16 %v1093
        %v1107 = vunpack.c.l.b16 %v1094
        %v1108 = vunpack.c.l.b16 %v1095
        %v1109 = vunpack.c.l.b16 %v1096
        %v1110 = vpack.c.b16 %v1107, %v1106
        %v1111 = vpack.c.b16 %v1109, %v1108
        %1114 = vmatpush.bf16.msra.mxu0 0
        %1115 = vmatpush.bf16.msra.mxu0 0
        %1116 = vmatpush.bf16.msra.mxu0 0
        %1117 = vmatpush.bf16.msra.mxu0 0
        %1118 = vmatpush.bf16.msra.mxu0 0
        %1119 = vmatpush.bf16.msra.mxu0 0
        %1120 = vmatpush.bf16.msra.mxu0 %v1111
        %1121 = vmatpush.bf16.msra.mxu0 %v1110
        %1122 = vmatmul.bf16.gmra.mxu0 %v563
        %v1123 = vpop.f32.mrf.mxu0
        %v1124 = vadd.f32 %v1100, %v1123
        %v1125 = vpop.f32.mrf.mxu0
        %1126 = vdwg.mxu0
        %s1127 = scalar_lea.vmem %s8, 48
        %v1128 = vld [vmem:[%s1127] sm:$0xf]
        %v1129 = vld [vmem:[%s1127 + $0x4] sm:$0xf]
        %v1130 = vld [vmem:[%s1127 + $0x8] sm:$0xf]
        %v1131 = vld [vmem:[%s1127 + $0xc] sm:$0xf]
        %s1132 = scalar_lea.vmem %s9, 3
        %v1133 = vld [vmem:[%s1132] sm:$0x1]
        %v1135 = vperm.slane %v1133, 0
        %v1141 = vunpack.c.l.b16 %v1128
        %v1142 = vunpack.c.l.b16 %v1129
        %v1143 = vunpack.c.l.b16 %v1130
        %v1144 = vunpack.c.l.b16 %v1131
        %v1145 = vpack.c.b16 %v1142, %v1141
        %v1146 = vpack.c.b16 %v1144, %v1143
        %1149 = vmatpush.bf16.msra.mxu0 0
        %1150 = vmatpush.bf16.msra.mxu0 0
        %1151 = vmatpush.bf16.msra.mxu0 0
        %1152 = vmatpush.bf16.msra.mxu0 0
        %1153 = vmatpush.bf16.msra.mxu0 0
        %1154 = vmatpush.bf16.msra.mxu0 0
        %1155 = vmatpush.bf16.msra.mxu0 %v1146
        %1156 = vmatpush.bf16.msra.mxu0 %v1145
        %1157 = vmatmul.bf16.gmra.mxu0 %v599
        %v1158 = vpop.f32.mrf.mxu0
        %v1159 = vadd.f32 %v1135, %v1158
        %v1160 = vpop.f32.mrf.mxu0
        %1161 = vdwg.mxu0
        %v1162 = vpack.c.bf16 %v1089, %v1089
        %v1163 = vpack.c.bf16 %v1124, %v1124
        %v1165 = vsel %vm616, %v1162, 0
        %v1168 = vsel %vm616, %v1163, 0
        %1170 = vmatpush.bf16.xpose.msra.mxu0 0
        %1171 = vmatpush.bf16.xpose.msra.mxu0 0
        %1172 = vmatpush.bf16.xpose.msra.mxu0 0
        %1173 = vmatpush.bf16.xpose.msra.mxu0 0
        %1174 = vmatpush.bf16.xpose.msra.mxu0 0
        %1175 = vmatpush.bf16.xpose.msra.mxu0 0
        %1176 = vmatpush.bf16.xpose.msra.mxu0 0
        %1177 = vmatpush.bf16.xpose.msra.mxu0 %v1168
        %1178 = vmatmul.bf16.gmra.mxu0 %v1165
        %v1179 = vpop.f32.mrf.mxu0
        %v1180 = vadd.f32 0.0, %v1179
        %v1181 = vpop.f32.mrf.mxu0
        %1182 = vdwg.mxu0
        %v1183 = vsel %vm504, -3.4028235e+38, %v1180
        %v1184 = vsel %vm616, %v1183, -inf
        %1185 = vmax.xlane.f32.xlu0 %v1184
        %v1186 = vpop.xlane.xlu0 %1185
        %v1187 = vsub.f32 %v1183, %v1186
        %v1188 = vmul.f32 %v1187, 1.442695
        %v1189 = vpow.pop %v1188
        %v1190 = vsel %vm616, %v1189, 0.0
        %1191 = vadd.xlane.f32.xlu0 %v1190
        %v1192 = vpop.xlane.xlu0 %1191
        %v1193 = vrcp.pop %v1192
        %v1194 = vmul.f32 %v1189, %v1193
        %v1195 = vsel %vm504, 0.0, %v1194
        %v1196 = vpack.c.bf16 %v1195, %v1195
        %v1197 = vpack.c.bf16 %v1159, %v1159
        %v1199 = vsel %vm616, %v1196, 0
        %v1202 = vsel %vm654, %v1197, 0
        %1204 = vmatpush.bf16.msra.mxu0 0
        %1205 = vmatpush.bf16.msra.mxu0 0
        %1206 = vmatpush.bf16.msra.mxu0 0
        %1207 = vmatpush.bf16.msra.mxu0 0
        %1208 = vmatpush.bf16.msra.mxu0 0
        %1209 = vmatpush.bf16.msra.mxu0 0
        %1210 = vmatpush.bf16.msra.mxu0 0
        %1211 = vmatpush.bf16.msra.mxu0 %v1202
        %1212 = vmatmul.bf16.gmra.mxu0 %v1199
        %v1213 = vpop.f32.mrf.mxu0
        %v1214 = vadd.f32 0.0, %v1213
        %v1215 = vpop.f32.mrf.mxu0
        %1216 = vdwg.mxu0
        %v1217 = vpack.c.bf16 %v1214, %v1214
        %s1218 = scalar_lea.vmem %s10, 12
        %v1219 = vld [vmem:[%s1218] sm:$0xf]
        %v1221 = vsel %vm616, %v1217, 0
        %v1224 = vsel %vm654, %v1219, 0
        %1226 = vmatpush.bf16.msra.mxu0 0
        %1227 = vmatpush.bf16.msra.mxu0 0
        %1228 = vmatpush.bf16.msra.mxu0 0
        %1229 = vmatpush.bf16.msra.mxu0 0
        %1230 = vmatpush.bf16.msra.mxu0 0
        %1231 = vmatpush.bf16.msra.mxu0 0
        %1232 = vmatpush.bf16.msra.mxu0 0
        %1233 = vmatpush.bf16.msra.mxu0 %v1224
        %1234 = vmatmul.bf16.gmra.mxu0 %v1221
        %v1235 = vpop.f32.mrf.mxu0
        %v1236 = vadd.f32 0.0, %v1235
        %v1237 = vpop.f32.mrf.mxu0
        %1238 = vdwg.mxu0
        %v1239 = vadd.f32 %v1056, %v1236
        %v1240 = vld [vmem:[%s11] sm:$0x1]
        %v1242 = vperm.slane %v1240, 0
        %v1244 = vadd.f32 %v1239, %v1242
        %1245 = vst.msk [vmem:[%s473] sm:$0xff] %vm525, %v1244
        %s1246 = sand.u32 %s324, 1
        %s1247 = scalar_lea.sflag [#allocation3], %s1246
        %s1248 = sand.u32 %s324, 1
        %s1249 = smul.addr %s1248, 8
        %s1250 = scalar_lea.vmem [#allocation2], %s1249
        // Predicated region
        $region69: #{tpu_custom_call.1} parent=67 // pred_check
          %p1251 = pneg %p334
        $region70: #{tpu_custom_call.1} parent=67 // pred_check_branch
          %1253 = sbr.rel (%p1251) target = $region72
        $region71: #{tpu_custom_call.1} parent=67 // pred_region
          %1255 = vsyncadd %s1247, 0
          %s1256 = sadd.s32 %s31, %s30
          %s1257 = smul.addr %s1256, 8
          %s1258 = scalar_lea.hbm %s12, %s1257
          %s1260 = sshll.u32 %s1250, 4
          %s1261 = int_to_ptr.vmem [resolvable:$true] %s1260
          %s1262 = sshll.u32 %s1258, 4
          %s1263 = int_to_ptr.hbm [resolvable:$true] %s1262
          %1265 = dma.vmem_to_hbm [thread:$0]  %s1261, 128, %s1263, %s1247
        $region72: #{tpu_custom_call.1} parent=67 // pred_fallthru
          _
      $region68: #{tpu_custom_call.1} parent=5 // pred_fallthru
        _
      %p1266 = scmp.le.s32.totalorder 2, %s21
      // Predicated region
      $region73: #{tpu_custom_call.1} parent=5 // pred_check
        %p1267 = pneg %p1266
      $region74: #{tpu_custom_call.1} parent=5 // pred_check_branch
        %1269 = sbr.rel (%p1267) target = $region76
      $region75: #{tpu_custom_call.1} parent=5 // pred_region
        %s1270 = ssub.s32 %s21, 2
        // Predicated region
        $region77: #{tpu_custom_call.1} parent=75 // pred_check
          %p1271 = pneg %p340
        $region78: #{tpu_custom_call.1} parent=75 // pred_check_branch
          %1273 = sbr.rel (%p1271) target = $region80
        $region79: #{tpu_custom_call.1} parent=75 // pred_region
          %s1274 = sand.u32 %s325, 1
          %s1275 = scalar_lea.sflag [#allocation3], %s1274
          %s1276 = sand.u32 %s325, 1
          %s1277 = smul.addr %s1276, 8
          %s1278 = scalar_lea.vmem [#allocation2], %s1277
          %1280 = dma.done %s1275, 128
        $region80: #{tpu_custom_call.1} parent=75 // pred_fallthru
          _
      $region76: #{tpu_custom_call.1} parent=5 // pred_fallthru
        _
    $region6: #{tpu_custom_call.1} parent=1 // loop_footer
      %s25 = sadd.s32 1, %s21
    $region7: #{tpu_custom_call.1} parent=1 // loop_footer_branch
      %20 = sbr.rel target = $region3
    $region8: #{tpu_custom_call.1} parent=1 // loop_exit
      _
    %1281 = vsyncpa [#allocation3], 1
    %s1282 = scalar_lea.sflag [#allocation3], 1
    %1283 = vsyncpa %s1282, 1

</llo_original>
